<compile_context>
chip_gen: v7x
topology: tpu7x:2x2x1
jax: 0.10.0
libtpu: 0.0.40
codegen_flags: <defaults>
</compile_context>

<pallas_src>
from functools import partial

import jax
import jax.numpy as jnp
from jax.experimental import pallas as pl
from jax.experimental.pallas import tpu as pltpu


def rnn_classify_kernel(ids_ref, eih_ref, whh_ref, wc_ref, bc_ref, out_ref):
    """Fused gather + fully-unrolled RNN recurrence + classifier + softmax.

    ids_ref : (B, L)   int32 token ids, SMEM (scalar reads only)
    eih_ref : (Vp, H)  precomputed emb @ W_ih^T + (b_ih + b_hh), vocab-padded
    whh_ref : (H, H)   hidden->hidden weight, right-multiply layout (W_hh^T)
    wc_ref  : (H, Cp)  classifier weight, right-multiply layout, lane-padded
    bc_ref  : (1, Cp)  classifier bias, padded columns set to -1e30
    out_ref : (B, Cp)  softmax probabilities (padded columns ~ 0)
    """
    B, L = ids_ref.shape
    Vp, _ = eih_ref.shape

    # Hoist the VMEM-resident weights once (outside the unrolled loop).
    eih = eih_ref[...]
    whh = whh_ref[...]

    # Lane iota used to build one-hot rows from SMEM token-id scalars.
    iota_v = jax.lax.broadcasted_iota(jnp.int32, (1, Vp), 1)

    def gather_pre(t):
        # One-hot-as-matmul gather: (B, Vp) @ (Vp, H) -> (B, H).
        # B and L are tiny/static, so this unrolls to a few VPU selects plus
        # one small MXU matmul per step, all independent of the h recurrence.
        rows = [jnp.where(iota_v == ids_ref[b, t], 1.0, 0.0) for b in range(B)]
        onehot = rows[0] if B == 1 else jnp.concatenate(rows, axis=0)
        return jnp.dot(onehot, eih, preferred_element_type=jnp.float32)

    # Step 0: h_prev = 0, so h_1 = tanh(pre[0]) — skip the zero matmul.
    h = jnp.tanh(gather_pre(0))

    # Fully unrolled recurrence: one dependent MXU matmul + VALU add + EUP tanh
    # per step on the serial chain; the gather matmuls hang off the side.
    for t in range(1, L):
        h = jnp.tanh(
            gather_pre(t) + jnp.dot(h, whh, preferred_element_type=jnp.float32)
        )

    # Classifier: lane-dense (H, 128) padded weights -> single lane-dense store.
    logits = jnp.dot(h, wc_ref[...], preferred_element_type=jnp.float32) + bc_ref[...]

    # Numerically stable softmax; padded columns have logits ~ -1e30 -> exp = 0.
    m = jnp.max(logits, axis=-1, keepdims=True)
    e = jnp.exp(logits - m)
    inv_denom = pl.reciprocal(jnp.sum(e, axis=-1, keepdims=True), approx=False)
    out_ref[...] = e * inv_denom


def prepare_params(emb_table, w_ih, w_hh, b_ih, b_hh, w_cls, b_cls):
    """One-time preprocessing of torch-layout weights (NOT per forward call)."""
    V, _ = emb_table.shape
    H = w_hh.shape[0]
    C = w_cls.shape[0]
    Cp = max(128, pl.cdiv(C, 128) * 128)  # lane-pad classifier output
    Vp = max(128, pl.cdiv(V, 128) * 128)  # pad vocab so the gather matmul is (B,128)x(128,H)

    # Precomputed input projection per vocab row, RNN biases fused in.
    # Row 0 (padding_idx) correctly contributes just the bias, matching torch.
    eih = jnp.dot(emb_table.astype(jnp.float32), w_ih.T) + (b_ih + b_hh)   # (V, H)
    eih_pad = jnp.zeros((Vp, H), jnp.float32).at[:V].set(eih)
    whh_t = jnp.asarray(w_hh.T, jnp.float32)                               # (H, H)
    wc_pad = jnp.zeros((H, Cp), jnp.float32).at[:, :C].set(w_cls.T)
    bc_pad = jnp.full((1, Cp), -1e30, jnp.float32).at[0, :C].set(b_cls)

    params = dict(eih_pad=eih_pad, whh_t=whh_t, wc_pad=wc_pad, bc_pad=bc_pad)
    return params, C


@partial(jax.jit, static_argnames=("num_classes",))
def rnn_forward(token_ids, params, *, num_classes):
    """Whole forward pass = one fused pallas_call (plus a trailing slice)."""
    eih_pad = params["eih_pad"]
    whh_t = params["whh_t"]
    wc_pad = params["wc_pad"]
    bc_pad = params["bc_pad"]

    B, _ = token_ids.shape
    Cp = wc_pad.shape[1]

    smem = pl.BlockSpec(memory_space=pltpu.MemorySpace.SMEM)
    vmem = pl.BlockSpec(memory_space=pltpu.MemorySpace.VMEM)
    probs_pad = pl.pallas_call(
        rnn_classify_kernel,
        out_shape=jax.ShapeDtypeStruct((B, Cp), jnp.float32),
        in_specs=[smem, vmem, vmem, vmem, vmem],
        out_specs=vmem,
    )(token_ids.astype(jnp.int32), eih_pad, whh_t, wc_pad, bc_pad)

    return probs_pad[:, :num_classes]


def rnn_forward_ref(token_ids, emb_table, w_ih, w_hh, b_ih, b_hh, w_cls, b_cls):
    """Pure-JAX reference matching the PyTorch inference semantics."""
    x = emb_table[token_ids]                                   # (B, L, D)
    B, L, _ = x.shape
    H = w_hh.shape[0]
    h = jnp.zeros((B, H), jnp.float32)
    hp = jax.lax.Precision.HIGHEST
    for t in range(L):
        h = jnp.tanh(
            jnp.dot(x[:, t], w_ih.T, precision=hp) + b_ih
            + jnp.dot(h, w_hh.T, precision=hp) + b_hh
        )
    logits = jnp.dot(h, w_cls.T, precision=hp) + b_cls
    return jax.nn.softmax(logits, axis=-1)


if __name__ == "__main__":
    # Shapes consistent with the module: vocab V=10 (padding id 0), vector_dim
    # D=32, sentence_length L=8, hidden H=128 (fixed by nn.RNN(D,128)),
    # num_classes C=4, batch B=2.
    V, D, L, H, C, B = 10, 32, 8, 128, 4, 2

    key = jax.random.PRNGKey(0)
    k_emb, k_wih, k_whh, k_bih, k_bhh, k_wc, k_bc, k_x = jax.random.split(key, 8)

    scale = 0.1
    emb_table = scale * jax.random.normal(k_emb, (V, D), dtype=jnp.float32)
    emb_table = emb_table.at[0].set(0.0)  # padding_idx=0 -> zero embedding row
    w_ih = scale * jax.random.normal(k_wih, (H, D), dtype=jnp.float32)   # torch layout
    w_hh = scale * jax.random.normal(k_whh, (H, H), dtype=jnp.float32)   # torch layout
    b_ih = scale * jax.random.normal(k_bih, (H,), dtype=jnp.float32)
    b_hh = scale * jax.random.normal(k_bhh, (H,), dtype=jnp.float32)
    w_cls = scale * jax.random.normal(k_wc, (C, H), dtype=jnp.float32)   # torch layout
    b_cls = scale * jax.random.normal(k_bc, (C,), dtype=jnp.float32)

    token_ids = jax.random.randint(k_x, (B, L), minval=0, maxval=V, dtype=jnp.int32)

    # One-time weight preprocessing (outside the forward path).
    params, num_classes = prepare_params(
        emb_table, w_ih, w_hh, b_ih, b_hh, w_cls, b_cls
    )
    params = jax.tree_util.tree_map(jax.block_until_ready, params)

    probs = rnn_forward(token_ids, params, num_classes=num_classes)
    probs = jax.block_until_ready(probs)

    # Sanity: shape, softmax rows sum to ~1, matches pure-JAX reference.
    assert probs.shape == (B, C)
    assert jnp.allclose(jnp.sum(probs, axis=-1), 1.0, atol=1e-5)
    ref = rnn_forward_ref(
        token_ids, emb_table, w_ih, w_hh, b_ih, b_hh, w_cls, b_cls
    )
    assert jnp.allclose(probs, ref, atol=2e-3), jnp.max(jnp.abs(probs - ref))

    # TODO(synk): training branch (CrossEntropyLoss when y is not None) is not
    # implemented; only the y=None inference/softmax path is translated.
    print("KERNEL_OK")
</pallas_src>

<mosaic_0001>
module attributes {stable_mosaic.version = 11 : i64} {
  func.func @rnn_classify_kernel(%arg0: memref<2x8xi32, #tpu.memory_space<smem>>, %arg1: memref<128x128xf32, #tpu.memory_space<vmem>>, %arg2: memref<128x128xf32, #tpu.memory_space<vmem>>, %arg3: memref<128x128xf32, #tpu.memory_space<vmem>>, %arg4: memref<1x128xf32, #tpu.memory_space<vmem>>, %arg5: memref<2x128xf32, #tpu.memory_space<vmem>>) attributes {dimension_semantics = [], scalar_prefetch = 0 : i64, scratch_operands = 0 : i64, tpu.core_type = #tpu.core_type<tc>} {
    %c0 = arith.constant 0 : index
    %c0_0 = arith.constant 0 : index
    %0 = vector.load %arg1[%c0, %c0_0] : memref<128x128xf32, #tpu.memory_space<vmem>>, vector<128x128xf32>
    %c0_1 = arith.constant 0 : index
    %c0_2 = arith.constant 0 : index
    %1 = vector.load %arg2[%c0_1, %c0_2] : memref<128x128xf32, #tpu.memory_space<vmem>>, vector<128x128xf32>
    %2 = tpu.iota {dimensions = array<i32: 1>} : vector<1x128xi32>
    %c0_3 = arith.constant 0 : index
    %c0_4 = arith.constant 0 : index
    %3 = memref.load %arg0[%c0_3, %c0_4] : memref<2x8xi32, #tpu.memory_space<smem>>
    %4 = vector.broadcast %3 : i32 to vector<1x128xi32>
    %5 = arith.cmpi eq, %2, %4 : vector<1x128xi32>
    %cst = arith.constant 1.000000e+00 : f32
    %cst_5 = arith.constant 0.000000e+00 : f32
    %6 = vector.broadcast %cst : f32 to vector<1x128xf32>
    %7 = vector.broadcast %cst_5 : f32 to vector<1x128xf32>
    %8 = arith.select %5, %6, %7 : vector<1x128xi1>, vector<1x128xf32>
    %c1 = arith.constant 1 : index
    %c0_6 = arith.constant 0 : index
    %9 = memref.load %arg0[%c1, %c0_6] : memref<2x8xi32, #tpu.memory_space<smem>>
    %10 = vector.broadcast %9 : i32 to vector<1x128xi32>
    %11 = arith.cmpi eq, %2, %10 : vector<1x128xi32>
    %cst_7 = arith.constant 1.000000e+00 : f32
    %cst_8 = arith.constant 0.000000e+00 : f32
    %12 = vector.broadcast %cst_7 : f32 to vector<1x128xf32>
    %13 = vector.broadcast %cst_8 : f32 to vector<1x128xf32>
    %14 = arith.select %11, %12, %13 : vector<1x128xi1>, vector<1x128xf32>
    %15 = tpu.concatenate %8, %14 in 0 : vector<1x128xf32>, vector<1x128xf32> -> vector<2x128xf32>
    %cst_9 = arith.constant dense<0.000000e+00> : vector<2x128xf32>
    %16 = tpu.matmul %15, %0, %cst_9 {dimension_numbers = #tpu.dot_dimension_numbers<[1], [0], [0], [1], [0, 0, 1, 1], [], []>} : vector<2x128xf32>, vector<128x128xf32>, vector<2x128xf32> -> vector<2x128xf32>
    %17 = math.tanh %16 : vector<2x128xf32>
    %c0_10 = arith.constant 0 : index
    %c1_11 = arith.constant 1 : index
    %18 = memref.load %arg0[%c0_10, %c1_11] : memref<2x8xi32, #tpu.memory_space<smem>>
    %19 = vector.broadcast %18 : i32 to vector<1x128xi32>
    %20 = arith.cmpi eq, %2, %19 : vector<1x128xi32>
    %cst_12 = arith.constant 1.000000e+00 : f32
    %cst_13 = arith.constant 0.000000e+00 : f32
    %21 = vector.broadcast %cst_12 : f32 to vector<1x128xf32>
    %22 = vector.broadcast %cst_13 : f32 to vector<1x128xf32>
    %23 = arith.select %20, %21, %22 : vector<1x128xi1>, vector<1x128xf32>
    %c1_14 = arith.constant 1 : index
    %c1_15 = arith.constant 1 : index
    %24 = memref.load %arg0[%c1_14, %c1_15] : memref<2x8xi32, #tpu.memory_space<smem>>
    %25 = vector.broadcast %24 : i32 to vector<1x128xi32>
    %26 = arith.cmpi eq, %2, %25 : vector<1x128xi32>
    %cst_16 = arith.constant 1.000000e+00 : f32
    %cst_17 = arith.constant 0.000000e+00 : f32
    %27 = vector.broadcast %cst_16 : f32 to vector<1x128xf32>
    %28 = vector.broadcast %cst_17 : f32 to vector<1x128xf32>
    %29 = arith.select %26, %27, %28 : vector<1x128xi1>, vector<1x128xf32>
    %30 = tpu.concatenate %23, %29 in 0 : vector<1x128xf32>, vector<1x128xf32> -> vector<2x128xf32>
    %cst_18 = arith.constant dense<0.000000e+00> : vector<2x128xf32>
    %31 = tpu.matmul %30, %0, %cst_18 {dimension_numbers = #tpu.dot_dimension_numbers<[1], [0], [0], [1], [0, 0, 1, 1], [], []>} : vector<2x128xf32>, vector<128x128xf32>, vector<2x128xf32> -> vector<2x128xf32>
    %cst_19 = arith.constant dense<0.000000e+00> : vector<2x128xf32>
    %32 = tpu.matmul %17, %1, %cst_19 {dimension_numbers = #tpu.dot_dimension_numbers<[1], [0], [0], [1], [0, 0, 1, 1], [], []>} : vector<2x128xf32>, vector<128x128xf32>, vector<2x128xf32> -> vector<2x128xf32>
    %33 = arith.addf %31, %32 : vector<2x128xf32>
    %34 = math.tanh %33 : vector<2x128xf32>
    %c0_20 = arith.constant 0 : index
    %c2 = arith.constant 2 : index
    %35 = memref.load %arg0[%c0_20, %c2] : memref<2x8xi32, #tpu.memory_space<smem>>
    %36 = vector.broadcast %35 : i32 to vector<1x128xi32>
    %37 = arith.cmpi eq, %2, %36 : vector<1x128xi32>
    %cst_21 = arith.constant 1.000000e+00 : f32
    %cst_22 = arith.constant 0.000000e+00 : f32
    %38 = vector.broadcast %cst_21 : f32 to vector<1x128xf32>
    %39 = vector.broadcast %cst_22 : f32 to vector<1x128xf32>
    %40 = arith.select %37, %38, %39 : vector<1x128xi1>, vector<1x128xf32>
    %c1_23 = arith.constant 1 : index
    %c2_24 = arith.constant 2 : index
    %41 = memref.load %arg0[%c1_23, %c2_24] : memref<2x8xi32, #tpu.memory_space<smem>>
    %42 = vector.broadcast %41 : i32 to vector<1x128xi32>
    %43 = arith.cmpi eq, %2, %42 : vector<1x128xi32>
    %cst_25 = arith.constant 1.000000e+00 : f32
    %cst_26 = arith.constant 0.000000e+00 : f32
    %44 = vector.broadcast %cst_25 : f32 to vector<1x128xf32>
    %45 = vector.broadcast %cst_26 : f32 to vector<1x128xf32>
    %46 = arith.select %43, %44, %45 : vector<1x128xi1>, vector<1x128xf32>
    %47 = tpu.concatenate %40, %46 in 0 : vector<1x128xf32>, vector<1x128xf32> -> vector<2x128xf32>
    %cst_27 = arith.constant dense<0.000000e+00> : vector<2x128xf32>
    %48 = tpu.matmul %47, %0, %cst_27 {dimension_numbers = #tpu.dot_dimension_numbers<[1], [0], [0], [1], [0, 0, 1, 1], [], []>} : vector<2x128xf32>, vector<128x128xf32>, vector<2x128xf32> -> vector<2x128xf32>
    %cst_28 = arith.constant dense<0.000000e+00> : vector<2x128xf32>
    %49 = tpu.matmul %34, %1, %cst_28 {dimension_numbers = #tpu.dot_dimension_numbers<[1], [0], [0], [1], [0, 0, 1, 1], [], []>} : vector<2x128xf32>, vector<128x128xf32>, vector<2x128xf32> -> vector<2x128xf32>
    %50 = arith.addf %48, %49 : vector<2x128xf32>
    %51 = math.tanh %50 : vector<2x128xf32>
    %c0_29 = arith.constant 0 : index
    %c3 = arith.constant 3 : index
    %52 = memref.load %arg0[%c0_29, %c3] : memref<2x8xi32, #tpu.memory_space<smem>>
    %53 = vector.broadcast %52 : i32 to vector<1x128xi32>
    %54 = arith.cmpi eq, %2, %53 : vector<1x128xi32>
    %cst_30 = arith.constant 1.000000e+00 : f32
    %cst_31 = arith.constant 0.000000e+00 : f32
    %55 = vector.broadcast %cst_30 : f32 to vector<1x128xf32>
    %56 = vector.broadcast %cst_31 : f32 to vector<1x128xf32>
    %57 = arith.select %54, %55, %56 : vector<1x128xi1>, vector<1x128xf32>
    %c1_32 = arith.constant 1 : index
    %c3_33 = arith.constant 3 : index
    %58 = memref.load %arg0[%c1_32, %c3_33] : memref<2x8xi32, #tpu.memory_space<smem>>
    %59 = vector.broadcast %58 : i32 to vector<1x128xi32>
    %60 = arith.cmpi eq, %2, %59 : vector<1x128xi32>
    %cst_34 = arith.constant 1.000000e+00 : f32
    %cst_35 = arith.constant 0.000000e+00 : f32
    %61 = vector.broadcast %cst_34 : f32 to vector<1x128xf32>
    %62 = vector.broadcast %cst_35 : f32 to vector<1x128xf32>
    %63 = arith.select %60, %61, %62 : vector<1x128xi1>, vector<1x128xf32>
    %64 = tpu.concatenate %57, %63 in 0 : vector<1x128xf32>, vector<1x128xf32> -> vector<2x128xf32>
    %cst_36 = arith.constant dense<0.000000e+00> : vector<2x128xf32>
    %65 = tpu.matmul %64, %0, %cst_36 {dimension_numbers = #tpu.dot_dimension_numbers<[1], [0], [0], [1], [0, 0, 1, 1], [], []>} : vector<2x128xf32>, vector<128x128xf32>, vector<2x128xf32> -> vector<2x128xf32>
    %cst_37 = arith.constant dense<0.000000e+00> : vector<2x128xf32>
    %66 = tpu.matmul %51, %1, %cst_37 {dimension_numbers = #tpu.dot_dimension_numbers<[1], [0], [0], [1], [0, 0, 1, 1], [], []>} : vector<2x128xf32>, vector<128x128xf32>, vector<2x128xf32> -> vector<2x128xf32>
    %67 = arith.addf %65, %66 : vector<2x128xf32>
    %68 = math.tanh %67 : vector<2x128xf32>
    %c0_38 = arith.constant 0 : index
    %c4 = arith.constant 4 : index
    %69 = memref.load %arg0[%c0_38, %c4] : memref<2x8xi32, #tpu.memory_space<smem>>
    %70 = vector.broadcast %69 : i32 to vector<1x128xi32>
    %71 = arith.cmpi eq, %2, %70 : vector<1x128xi32>
    %cst_39 = arith.constant 1.000000e+00 : f32
    %cst_40 = arith.constant 0.000000e+00 : f32
    %72 = vector.broadcast %cst_39 : f32 to vector<1x128xf32>
    %73 = vector.broadcast %cst_40 : f32 to vector<1x128xf32>
    %74 = arith.select %71, %72, %73 : vector<1x128xi1>, vector<1x128xf32>
    %c1_41 = arith.constant 1 : index
    %c4_42 = arith.constant 4 : index
    %75 = memref.load %arg0[%c1_41, %c4_42] : memref<2x8xi32, #tpu.memory_space<smem>>
    %76 = vector.broadcast %75 : i32 to vector<1x128xi32>
    %77 = arith.cmpi eq, %2, %76 : vector<1x128xi32>
    %cst_43 = arith.constant 1.000000e+00 : f32
    %cst_44 = arith.constant 0.000000e+00 : f32
    %78 = vector.broadcast %cst_43 : f32 to vector<1x128xf32>
    %79 = vector.broadcast %cst_44 : f32 to vector<1x128xf32>
    %80 = arith.select %77, %78, %79 : vector<1x128xi1>, vector<1x128xf32>
    %81 = tpu.concatenate %74, %80 in 0 : vector<1x128xf32>, vector<1x128xf32> -> vector<2x128xf32>
    %cst_45 = arith.constant dense<0.000000e+00> : vector<2x128xf32>
    %82 = tpu.matmul %81, %0, %cst_45 {dimension_numbers = #tpu.dot_dimension_numbers<[1], [0], [0], [1], [0, 0, 1, 1], [], []>} : vector<2x128xf32>, vector<128x128xf32>, vector<2x128xf32> -> vector<2x128xf32>
    %cst_46 = arith.constant dense<0.000000e+00> : vector<2x128xf32>
    %83 = tpu.matmul %68, %1, %cst_46 {dimension_numbers = #tpu.dot_dimension_numbers<[1], [0], [0], [1], [0, 0, 1, 1], [], []>} : vector<2x128xf32>, vector<128x128xf32>, vector<2x128xf32> -> vector<2x128xf32>
    %84 = arith.addf %82, %83 : vector<2x128xf32>
    %85 = math.tanh %84 : vector<2x128xf32>
    %c0_47 = arith.constant 0 : index
    %c5 = arith.constant 5 : index
    %86 = memref.load %arg0[%c0_47, %c5] : memref<2x8xi32, #tpu.memory_space<smem>>
    %87 = vector.broadcast %86 : i32 to vector<1x128xi32>
    %88 = arith.cmpi eq, %2, %87 : vector<1x128xi32>
    %cst_48 = arith.constant 1.000000e+00 : f32
    %cst_49 = arith.constant 0.000000e+00 : f32
    %89 = vector.broadcast %cst_48 : f32 to vector<1x128xf32>
    %90 = vector.broadcast %cst_49 : f32 to vector<1x128xf32>
    %91 = arith.select %88, %89, %90 : vector<1x128xi1>, vector<1x128xf32>
    %c1_50 = arith.constant 1 : index
    %c5_51 = arith.constant 5 : index
    %92 = memref.load %arg0[%c1_50, %c5_51] : memref<2x8xi32, #tpu.memory_space<smem>>
    %93 = vector.broadcast %92 : i32 to vector<1x128xi32>
    %94 = arith.cmpi eq, %2, %93 : vector<1x128xi32>
    %cst_52 = arith.constant 1.000000e+00 : f32
    %cst_53 = arith.constant 0.000000e+00 : f32
    %95 = vector.broadcast %cst_52 : f32 to vector<1x128xf32>
    %96 = vector.broadcast %cst_53 : f32 to vector<1x128xf32>
    %97 = arith.select %94, %95, %96 : vector<1x128xi1>, vector<1x128xf32>
    %98 = tpu.concatenate %91, %97 in 0 : vector<1x128xf32>, vector<1x128xf32> -> vector<2x128xf32>
    %cst_54 = arith.constant dense<0.000000e+00> : vector<2x128xf32>
    %99 = tpu.matmul %98, %0, %cst_54 {dimension_numbers = #tpu.dot_dimension_numbers<[1], [0], [0], [1], [0, 0, 1, 1], [], []>} : vector<2x128xf32>, vector<128x128xf32>, vector<2x128xf32> -> vector<2x128xf32>
    %cst_55 = arith.constant dense<0.000000e+00> : vector<2x128xf32>
    %100 = tpu.matmul %85, %1, %cst_55 {dimension_numbers = #tpu.dot_dimension_numbers<[1], [0], [0], [1], [0, 0, 1, 1], [], []>} : vector<2x128xf32>, vector<128x128xf32>, vector<2x128xf32> -> vector<2x128xf32>
    %101 = arith.addf %99, %100 : vector<2x128xf32>
    %102 = math.tanh %101 : vector<2x128xf32>
    %c0_56 = arith.constant 0 : index
    %c6 = arith.constant 6 : index
    %103 = memref.load %arg0[%c0_56, %c6] : memref<2x8xi32, #tpu.memory_space<smem>>
    %104 = vector.broadcast %103 : i32 to vector<1x128xi32>
    %105 = arith.cmpi eq, %2, %104 : vector<1x128xi32>
    %cst_57 = arith.constant 1.000000e+00 : f32
    %cst_58 = arith.constant 0.000000e+00 : f32
    %106 = vector.broadcast %cst_57 : f32 to vector<1x128xf32>
    %107 = vector.broadcast %cst_58 : f32 to vector<1x128xf32>
    %108 = arith.select %105, %106, %107 : vector<1x128xi1>, vector<1x128xf32>
    %c1_59 = arith.constant 1 : index
    %c6_60 = arith.constant 6 : index
    %109 = memref.load %arg0[%c1_59, %c6_60] : memref<2x8xi32, #tpu.memory_space<smem>>
    %110 = vector.broadcast %109 : i32 to vector<1x128xi32>
    %111 = arith.cmpi eq, %2, %110 : vector<1x128xi32>
    %cst_61 = arith.constant 1.000000e+00 : f32
    %cst_62 = arith.constant 0.000000e+00 : f32
    %112 = vector.broadcast %cst_61 : f32 to vector<1x128xf32>
    %113 = vector.broadcast %cst_62 : f32 to vector<1x128xf32>
    %114 = arith.select %111, %112, %113 : vector<1x128xi1>, vector<1x128xf32>
    %115 = tpu.concatenate %108, %114 in 0 : vector<1x128xf32>, vector<1x128xf32> -> vector<2x128xf32>
    %cst_63 = arith.constant dense<0.000000e+00> : vector<2x128xf32>
    %116 = tpu.matmul %115, %0, %cst_63 {dimension_numbers = #tpu.dot_dimension_numbers<[1], [0], [0], [1], [0, 0, 1, 1], [], []>} : vector<2x128xf32>, vector<128x128xf32>, vector<2x128xf32> -> vector<2x128xf32>
    %cst_64 = arith.constant dense<0.000000e+00> : vector<2x128xf32>
    %117 = tpu.matmul %102, %1, %cst_64 {dimension_numbers = #tpu.dot_dimension_numbers<[1], [0], [0], [1], [0, 0, 1, 1], [], []>} : vector<2x128xf32>, vector<128x128xf32>, vector<2x128xf32> -> vector<2x128xf32>
    %118 = arith.addf %116, %117 : vector<2x128xf32>
    %119 = math.tanh %118 : vector<2x128xf32>
    %c0_65 = arith.constant 0 : index
    %c7 = arith.constant 7 : index
    %120 = memref.load %arg0[%c0_65, %c7] : memref<2x8xi32, #tpu.memory_space<smem>>
    %121 = vector.broadcast %120 : i32 to vector<1x128xi32>
    %122 = arith.cmpi eq, %2, %121 : vector<1x128xi32>
    %cst_66 = arith.constant 1.000000e+00 : f32
    %cst_67 = arith.constant 0.000000e+00 : f32
    %123 = vector.broadcast %cst_66 : f32 to vector<1x128xf32>
    %124 = vector.broadcast %cst_67 : f32 to vector<1x128xf32>
    %125 = arith.select %122, %123, %124 : vector<1x128xi1>, vector<1x128xf32>
    %c1_68 = arith.constant 1 : index
    %c7_69 = arith.constant 7 : index
    %126 = memref.load %arg0[%c1_68, %c7_69] : memref<2x8xi32, #tpu.memory_space<smem>>
    %127 = vector.broadcast %126 : i32 to vector<1x128xi32>
    %128 = arith.cmpi eq, %2, %127 : vector<1x128xi32>
    %cst_70 = arith.constant 1.000000e+00 : f32
    %cst_71 = arith.constant 0.000000e+00 : f32
    %129 = vector.broadcast %cst_70 : f32 to vector<1x128xf32>
    %130 = vector.broadcast %cst_71 : f32 to vector<1x128xf32>
    %131 = arith.select %128, %129, %130 : vector<1x128xi1>, vector<1x128xf32>
    %132 = tpu.concatenate %125, %131 in 0 : vector<1x128xf32>, vector<1x128xf32> -> vector<2x128xf32>
    %cst_72 = arith.constant dense<0.000000e+00> : vector<2x128xf32>
    %133 = tpu.matmul %132, %0, %cst_72 {dimension_numbers = #tpu.dot_dimension_numbers<[1], [0], [0], [1], [0, 0, 1, 1], [], []>} : vector<2x128xf32>, vector<128x128xf32>, vector<2x128xf32> -> vector<2x128xf32>
    %cst_73 = arith.constant dense<0.000000e+00> : vector<2x128xf32>
    %134 = tpu.matmul %119, %1, %cst_73 {dimension_numbers = #tpu.dot_dimension_numbers<[1], [0], [0], [1], [0, 0, 1, 1], [], []>} : vector<2x128xf32>, vector<128x128xf32>, vector<2x128xf32> -> vector<2x128xf32>
    %135 = arith.addf %133, %134 : vector<2x128xf32>
    %136 = math.tanh %135 : vector<2x128xf32>
    %c0_74 = arith.constant 0 : index
    %c0_75 = arith.constant 0 : index
    %137 = vector.load %arg3[%c0_74, %c0_75] : memref<128x128xf32, #tpu.memory_space<vmem>>, vector<128x128xf32>
    %cst_76 = arith.constant dense<0.000000e+00> : vector<2x128xf32>
    %138 = tpu.matmul %136, %137, %cst_76 {dimension_numbers = #tpu.dot_dimension_numbers<[1], [0], [0], [1], [0, 0, 1, 1], [], []>} : vector<2x128xf32>, vector<128x128xf32>, vector<2x128xf32> -> vector<2x128xf32>
    %c0_77 = arith.constant 0 : index
    %c0_78 = arith.constant 0 : index
    %139 = vector.load %arg4[%c0_77, %c0_78] : memref<1x128xf32, #tpu.memory_space<vmem>>, vector<1x128xf32>
    %140 = vector.broadcast %139 : vector<1x128xf32> to vector<2x128xf32>
    %141 = arith.addf %138, %140 : vector<2x128xf32>
    %cst_79 = arith.constant dense<0xFF800000> : vector<2xf32>
    %142 = vector.multi_reduction <maximumf>, %141, %cst_79 [1] : vector<2x128xf32> to vector<2xf32>
    %143 = vector.shape_cast %142 : vector<2xf32> to vector<2x1xf32>
    %144 = vector.broadcast %143 : vector<2x1xf32> to vector<2x128xf32>
    %145 = arith.subf %141, %144 : vector<2x128xf32>
    %146 = math.exp %145 : vector<2x128xf32>
    %cst_80 = arith.constant dense<0.000000e+00> : vector<2xf32>
    %147 = vector.multi_reduction <add>, %146, %cst_80 [1] : vector<2x128xf32> to vector<2xf32>
    %148 = vector.shape_cast %147 : vector<2xf32> to vector<2x1xf32>
    %149 = tpu.reciprocal %148 : vector<2x1xf32> -> vector<2x1xf32>
    %150 = vector.broadcast %149 : vector<2x1xf32> to vector<2x128xf32>
    %151 = arith.mulf %146, %150 : vector<2x128xf32>
    %c0_81 = arith.constant 0 : index
    %c0_82 = arith.constant 0 : index
    %152 = vector.load %arg5[%c0_81, %c0_82] : memref<2x128xf32, #tpu.memory_space<vmem>>, vector<2x128xf32>
    tpu.vector_store %arg5[%c0_81, %c0_82], %151 {strides = array<i32>} : memref<2x128xf32, #tpu.memory_space<vmem>>, vector<2x128xf32>,
    return
  }
}

</mosaic_0001>

<llo_original>
// kernel: rnn_forward.1
$region0: #{rnn_forward.1}
  #allocation0 [shape = 'u32[]', space=smem, size = 0x4, offset = 0x4, fixed_abs, tag = 'smem constant byte address 0x4 - core index']
  #allocation1 [shape = 'u32[144,128]{1,0:T(1,128)}', space=vmem, size = 0x12000, scoped, tag = 'internal scratch']
  %s0 = inlined_call_operand.hbm [shape: s32[2,8], index: 0, kind: input, shape index: {}]
  %s1 = inlined_call_operand.hbm [shape: f32[128,128], index: 1, kind: input, shape index: {}]
  %s2 = inlined_call_operand.hbm [shape: f32[128,128], index: 2, kind: input, shape index: {}]
  %s3 = inlined_call_operand.hbm [shape: f32[128,128], index: 3, kind: input, shape index: {}]
  %s4 = inlined_call_operand.vmem [shape: f32[1,128], index: 4, kind: input, shape index: {}]
  %s5 = inlined_call_operand.hbm [shape: f32[2,128], index: 5, kind: output, shape index: {}]
  %s6 = sld [smem:[#allocation0]]
  $region46: #{rnn_forward.1} parent=0
    _
  %s8 = ssub.s32 1, %s6
  %s9 = scalar_select 0, %s8, %s6
  $region1: #{rnn_forward.1} parent=0
    #allocation2 [shape = 'u8[1024]{0}', space=smem, size = 0x400, scoped, tag = 'input window, operand 0, single buffered']
    #allocation3 [shape = 's32[1]{0}', space=sflag, size = 0x4, scoped, tag = 'scoped memory for rnn_forward.1']
    #allocation4 [shape = 's32[1]{0}', space=sflag, size = 0x4, scoped, tag = 'scoped memory for rnn_forward.1']
    #allocation5 [shape = 's32[1]{0}', space=sflag, size = 0x4, scoped, tag = 'scoped memory for rnn_forward.1']
    #allocation6 [shape = 'u8[65536]{0}', space=vmem, size = 0x10000, scoped, tag = 'input window, operand 1, single buffered']
    #allocation7 [shape = 'u8[65536]{0}', space=vmem, size = 0x10000, scoped, tag = 'input window, operand 2, single buffered']
    #allocation8 [shape = 's32[1]{0}', space=sflag, size = 0x4, scoped, tag = 'scoped memory for rnn_forward.1']
    #allocation9 [shape = 'u8[65536]{0}', space=vmem, size = 0x10000, scoped, tag = 'input window, operand 3, single buffered']
    #allocation10 [shape = 'u8[1024]{0}', space=vmem, size = 0x400, scoped, tag = 'output window, operand 0, single buffered']
    %10 = vsyncpa [#allocation5], 0
    %11 = vsyncpa [#allocation3], 0
    %12 = vsyncpa [#allocation8], 0
    %13 = vsyncpa [#allocation4], 0
    // Predicated region
    $region2: #{rnn_forward.1} parent=1 // pred_check
      _
    $region3: #{rnn_forward.1} parent=1 // pred_check_branch
      %15 = sbr.rel (0) target = $region5
    $region4: #{rnn_forward.1} parent=1 // pred_region
      %s17 = ssub.s32 32, 32
      %18 = vsyncadd [#allocation5], %s17
      %21 = dma.hbm_to_smem %s0, 32, [#allocation2], [#allocation5]
    $region5: #{rnn_forward.1} parent=1 // pred_fallthru
      _
    // Predicated region
    $region6: #{rnn_forward.1} parent=1 // pred_check
      _
    $region7: #{rnn_forward.1} parent=1 // pred_check_branch
      %23 = sbr.rel (0) target = $region9
    $region8: #{rnn_forward.1} parent=1 // pred_region
      %s25 = ssub.s32 2048, 2048
      %26 = vsyncadd [#allocation3], %s25
      %s27 = sshll.u32 [#allocation6], 4
      %s28 = int_to_ptr.vmem [resolvable:$true] %s27
      %33 = dma.hbm_to_vmem [thread:$0]  %s1, 2048, %s28, [#allocation3], 128, 128, 8
    $region9: #{rnn_forward.1} parent=1 // pred_fallthru
      _
    // Predicated region
    $region10: #{rnn_forward.1} parent=1 // pred_check
      _
    $region11: #{rnn_forward.1} parent=1 // pred_check_branch
      %35 = sbr.rel (0) target = $region13
    $region12: #{rnn_forward.1} parent=1 // pred_region
      %s37 = ssub.s32 2048, 2048
      %38 = vsyncadd [#allocation8], %s37
      %s39 = sshll.u32 [#allocation7], 4
      %s40 = int_to_ptr.vmem [resolvable:$true] %s39
      %45 = dma.hbm_to_vmem [thread:$0]  %s2, 2048, %s40, [#allocation8], 128, 128, 8
    $region13: #{rnn_forward.1} parent=1 // pred_fallthru
      _
    // Predicated region
    $region14: #{rnn_forward.1} parent=1 // pred_check
      _
    $region15: #{rnn_forward.1} parent=1 // pred_check_branch
      %47 = sbr.rel (0) target = $region17
    $region16: #{rnn_forward.1} parent=1 // pred_region
      %s49 = ssub.s32 2048, 2048
      %50 = vsyncadd [#allocation8], %s49
      %s51 = sshll.u32 [#allocation9], 4
      %s52 = int_to_ptr.vmem [resolvable:$true] %s51
      %57 = dma.hbm_to_vmem [thread:$0]  %s3, 2048, %s52, [#allocation8], 128, 128, 8
    $region17: #{rnn_forward.1} parent=1 // pred_fallthru
      _
    // Predicated region
    $region18: #{rnn_forward.1} parent=1 // pred_check
      _
    $region19: #{rnn_forward.1} parent=1 // pred_check_branch
      %59 = sbr.rel (0) target = $region21
    $region20: #{rnn_forward.1} parent=1 // pred_region
      _
    $region21: #{rnn_forward.1} parent=1 // pred_fallthru
      _
    // Predicated region
    $region22: #{rnn_forward.1} parent=1 // pred_check
      _
    $region23: #{rnn_forward.1} parent=1 // pred_check_branch
      %61 = sbr.rel (0) target = $region25
    $region24: #{rnn_forward.1} parent=1 // pred_region
      %62 = dma.done [#allocation5], 32
    $region25: #{rnn_forward.1} parent=1 // pred_fallthru
      _
    // Predicated region
    $region26: #{rnn_forward.1} parent=1 // pred_check
      _
    $region27: #{rnn_forward.1} parent=1 // pred_check_branch
      %64 = sbr.rel (0) target = $region29
    $region28: #{rnn_forward.1} parent=1 // pred_region
      %65 = dma.done [#allocation3], 2048
    $region29: #{rnn_forward.1} parent=1 // pred_fallthru
      _
    // Predicated region
    $region30: #{rnn_forward.1} parent=1 // pred_check
      _
    $region31: #{rnn_forward.1} parent=1 // pred_check_branch
      %67 = sbr.rel (0) target = $region33
    $region32: #{rnn_forward.1} parent=1 // pred_region
      %68 = dma.done [#allocation8], 2048
    $region33: #{rnn_forward.1} parent=1 // pred_fallthru
      _
    // Predicated region
    $region34: #{rnn_forward.1} parent=1 // pred_check
      _
    $region35: #{rnn_forward.1} parent=1 // pred_check_branch
      %70 = sbr.rel (0) target = $region37
    $region36: #{rnn_forward.1} parent=1 // pred_region
      %71 = dma.done [#allocation8], 2048
    $region37: #{rnn_forward.1} parent=1 // pred_fallthru
      _
    %72 = sfence
    %v73 = vld [vmem:[#allocation6] sm:$0xff]
    %v74 = vld [vmem:[#allocation6 + $0x8] sm:$0xff]
    %v75 = vld [vmem:[#allocation6 + $0x10] sm:$0xff]
    %v76 = vld [vmem:[#allocation6 + $0x18] sm:$0xff]
    %v77 = vld [vmem:[#allocation6 + $0x20] sm:$0xff]
    %v78 = vld [vmem:[#allocation6 + $0x28] sm:$0xff]
    %v79 = vld [vmem:[#allocation6 + $0x30] sm:$0xff]
    %v80 = vld [vmem:[#allocation6 + $0x38] sm:$0xff]
    %v81 = vld [vmem:[#allocation6 + $0x40] sm:$0xff]
    %v82 = vld [vmem:[#allocation6 + $0x48] sm:$0xff]
    %v83 = vld [vmem:[#allocation6 + $0x50] sm:$0xff]
    %v84 = vld [vmem:[#allocation6 + $0x58] sm:$0xff]
    %v85 = vld [vmem:[#allocation6 + $0x60] sm:$0xff]
    %v86 = vld [vmem:[#allocation6 + $0x68] sm:$0xff]
    %v87 = vld [vmem:[#allocation6 + $0x70] sm:$0xff]
    %v88 = vld [vmem:[#allocation6 + $0x78] sm:$0xff]
    %v89 = vld [vmem:[#allocation7] sm:$0xff]
    %v90 = vld [vmem:[#allocation7 + $0x8] sm:$0xff]
    %v91 = vld [vmem:[#allocation7 + $0x10] sm:$0xff]
    %v92 = vld [vmem:[#allocation7 + $0x18] sm:$0xff]
    %v93 = vld [vmem:[#allocation7 + $0x20] sm:$0xff]
    %v94 = vld [vmem:[#allocation7 + $0x28] sm:$0xff]
    %v95 = vld [vmem:[#allocation7 + $0x30] sm:$0xff]
    %v96 = vld [vmem:[#allocation7 + $0x38] sm:$0xff]
    %v97 = vld [vmem:[#allocation7 + $0x40] sm:$0xff]
    %v98 = vld [vmem:[#allocation7 + $0x48] sm:$0xff]
    %v99 = vld [vmem:[#allocation7 + $0x50] sm:$0xff]
    %v100 = vld [vmem:[#allocation7 + $0x58] sm:$0xff]
    %v101 = vld [vmem:[#allocation7 + $0x60] sm:$0xff]
    %v102 = vld [vmem:[#allocation7 + $0x68] sm:$0xff]
    %v103 = vld [vmem:[#allocation7 + $0x70] sm:$0xff]
    %v104 = vld [vmem:[#allocation7 + $0x78] sm:$0xff]
    %v105 = vlaneseq
    %v106 = vand.u32 %v105, 127
    %s107 = sld [smem:[#allocation2]]
    %v108 = vstv %s107
    %vm109 = vcmp.eq.s32.totalorder %v106, %v108
    %v110 = vsel %vm109, 1.0, 0.0
    %s111 = sld [smem:[#allocation2 + $0x80]]
    %v112 = vstv %s111
    %vm113 = vcmp.eq.s32.totalorder %v106, %v112
    %v114 = vsel %vm113, 1.0, 0.0
    %vm115 = vcmask 1040384
    %v116 = vsel %vm115, %v110, %v114
    %117 = vmatprep.subr.mxu0 0.0
    %118 = vmatpush1.msra.mxu0 %v73
    %119 = vmatprep.subr.mxu0 0.0
    %120 = vmatpush1.msra.mxu0 %v74
    %121 = vmatprep.subr.mxu0 0.0
    %122 = vmatpush1.msra.mxu0 %v75
    %123 = vmatprep.subr.mxu0 0.0
    %124 = vmatpush1.msra.mxu0 %v76
    %125 = vmatprep.subr.mxu0 0.0
    %126 = vmatpush1.msra.mxu0 %v77
    %127 = vmatprep.subr.mxu0 0.0
    %128 = vmatpush1.msra.mxu0 %v78
    %129 = vmatprep.subr.mxu0 0.0
    %130 = vmatpush1.msra.mxu0 %v79
    %131 = vmatprep.subr.mxu0 0.0
    %132 = vmatpush1.msra.mxu0 %v80
    %133 = vmatprep.subr.mxu0 0.0
    %134 = vmatpush1.msra.mxu0 %v81
    %135 = vmatprep.subr.mxu0 0.0
    %136 = vmatpush1.msra.mxu0 %v82
    %137 = vmatprep.subr.mxu0 0.0
    %138 = vmatpush1.msra.mxu0 %v83
    %139 = vmatprep.subr.mxu0 0.0
    %140 = vmatpush1.msra.mxu0 %v84
    %141 = vmatprep.subr.mxu0 0.0
    %142 = vmatpush1.msra.mxu0 %v85
    %143 = vmatprep.subr.mxu0 0.0
    %144 = vmatpush1.msra.mxu0 %v86
    %145 = vmatprep.subr.mxu0 0.0
    %146 = vmatpush1.msra.mxu0 %v87
    %147 = vmatprep.subr.mxu0 0.0
    %148 = vmatpush1.msra.mxu0 %v88
    %149 = vmatprep.subr.mxu0 0.0
    %150 = vmatpush1.msra.mxu0 0.0
    %151 = vmatprep.subr.mxu0 0.0
    %152 = vmatpush1.msra.mxu0 0.0
    %153 = vmatprep.subr.mxu0 0.0
    %154 = vmatpush1.msra.mxu0 0.0
    %155 = vmatprep.subr.mxu0 0.0
    %156 = vmatpush1.msra.mxu0 0.0
    %157 = vmatprep.subr.mxu0 0.0
    %158 = vmatpush1.msra.mxu0 0.0
    %159 = vmatprep.subr.mxu0 0.0
    %160 = vmatpush1.msra.mxu0 0.0
    %161 = vmatprep.subr.mxu0 0.0
    %162 = vmatpush1.msra.mxu0 0.0
    %163 = vmatprep.subr.mxu0 0.0
    %164 = vmatpush1.msra.mxu0 0.0
    %165 = vmatprep.subr.mxu0 0.0
    %166 = vmatpush1.msra.mxu0 0.0
    %167 = vmatprep.subr.mxu0 0.0
    %168 = vmatpush1.msra.mxu0 0.0
    %169 = vmatprep.subr.mxu0 0.0
    %170 = vmatpush1.msra.mxu0 0.0
    %171 = vmatprep.subr.mxu0 0.0
    %172 = vmatpush1.msra.mxu0 0.0
    %173 = vmatprep.subr.mxu0 0.0
    %174 = vmatpush1.msra.mxu0 0.0
    %175 = vmatprep.subr.mxu0 0.0
    %176 = vmatpush1.msra.mxu0 0.0
    %177 = vmatprep.subr.mxu0 0.0
    %178 = vmatpush1.msra.mxu0 0.0
    %179 = vmatprep.subr.mxu0 0.0
    %180 = vmatpush1.msra.mxu0 0.0
    %181 = vmatprep.mubr.f32.mxu0 0.0
    %182 = vmatmul.mubr.f32.gmra.mrb[0].mxu0 %v116
    %v183 = vpop.f32.mrb[0].mxu0
    %v184 = vadd.f32 0.0, %v183
    %v185 = vpop.f32.mrb[0].mxu0
    %186 = vdwg.mxu0
    %v187 = vtanh.pop %v184
    %s188 = sld [smem:[#allocation2 + $0x1]]
    %v189 = vstv %s188
    %vm190 = vcmp.eq.s32.totalorder %v106, %v189
    %v191 = vsel %vm190, 1.0, 0.0
    %s192 = sld [smem:[#allocation2 + $0x81]]
    %v193 = vstv %s192
    %vm194 = vcmp.eq.s32.totalorder %v106, %v193
    %v195 = vsel %vm194, 1.0, 0.0
    %v196 = vsel %vm115, %v191, %v195
    %197 = vmatprep.subr.mxu0 0.0
    %198 = vmatpush1.msra.mxu0 %v89
    %199 = vmatprep.subr.mxu0 0.0
    %200 = vmatpush1.msra.mxu0 %v90
    %201 = vmatprep.subr.mxu0 0.0
    %202 = vmatpush1.msra.mxu0 %v91
    %203 = vmatprep.subr.mxu0 0.0
    %204 = vmatpush1.msra.mxu0 %v92
    %205 = vmatprep.subr.mxu0 0.0
    %206 = vmatpush1.msra.mxu0 %v93
    %207 = vmatprep.subr.mxu0 0.0
    %208 = vmatpush1.msra.mxu0 %v94
    %209 = vmatprep.subr.mxu0 0.0
    %210 = vmatpush1.msra.mxu0 %v95
    %211 = vmatprep.subr.mxu0 0.0
    %212 = vmatpush1.msra.mxu0 %v96
    %213 = vmatprep.subr.mxu0 0.0
    %214 = vmatpush1.msra.mxu0 %v97
    %215 = vmatprep.subr.mxu0 0.0
    %216 = vmatpush1.msra.mxu0 %v98
    %217 = vmatprep.subr.mxu0 0.0
    %218 = vmatpush1.msra.mxu0 %v99
    %219 = vmatprep.subr.mxu0 0.0
    %220 = vmatpush1.msra.mxu0 %v100
    %221 = vmatprep.subr.mxu0 0.0
    %222 = vmatpush1.msra.mxu0 %v101
    %223 = vmatprep.subr.mxu0 0.0
    %224 = vmatpush1.msra.mxu0 %v102
    %225 = vmatprep.subr.mxu0 0.0
    %226 = vmatpush1.msra.mxu0 %v103
    %227 = vmatprep.subr.mxu0 0.0
    %228 = vmatpush1.msra.mxu0 %v104
    %229 = vmatprep.subr.mxu0 0.0
    %230 = vmatpush1.msra.mxu0 0.0
    %231 = vmatprep.subr.mxu0 0.0
    %232 = vmatpush1.msra.mxu0 0.0
    %233 = vmatprep.subr.mxu0 0.0
    %234 = vmatpush1.msra.mxu0 0.0
    %235 = vmatprep.subr.mxu0 0.0
    %236 = vmatpush1.msra.mxu0 0.0
    %237 = vmatprep.subr.mxu0 0.0
    %238 = vmatpush1.msra.mxu0 0.0
    %239 = vmatprep.subr.mxu0 0.0
    %240 = vmatpush1.msra.mxu0 0.0
    %241 = vmatprep.subr.mxu0 0.0
    %242 = vmatpush1.msra.mxu0 0.0
    %243 = vmatprep.subr.mxu0 0.0
    %244 = vmatpush1.msra.mxu0 0.0
    %245 = vmatprep.subr.mxu0 0.0
    %246 = vmatpush1.msra.mxu0 0.0
    %247 = vmatprep.subr.mxu0 0.0
    %248 = vmatpush1.msra.mxu0 0.0
    %249 = vmatprep.subr.mxu0 0.0
    %250 = vmatpush1.msra.mxu0 0.0
    %251 = vmatprep.subr.mxu0 0.0
    %252 = vmatpush1.msra.mxu0 0.0
    %253 = vmatprep.subr.mxu0 0.0
    %254 = vmatpush1.msra.mxu0 0.0
    %255 = vmatprep.subr.mxu0 0.0
    %256 = vmatpush1.msra.mxu0 0.0
    %257 = vmatprep.subr.mxu0 0.0
    %258 = vmatpush1.msra.mxu0 0.0
    %259 = vmatprep.subr.mxu0 0.0
    %260 = vmatpush1.msra.mxu0 0.0
    %261 = vmatprep.mubr.f32.mxu0 0.0
    %262 = vmatmul.mubr.f32.gmra.mrb[0].mxu0 %v187
    %v263 = vpop.f32.mrb[0].mxu0
    %v264 = vadd.f32 0.0, %v263
    %v265 = vpop.f32.mrb[0].mxu0
    %266 = vdwg.mxu0
    %267 = vmatprep.subr.mxu0 0.0
    %268 = vmatpush1.msra.mxu0 %v73
    %269 = vmatprep.subr.mxu0 0.0
    %270 = vmatpush1.msra.mxu0 %v74
    %271 = vmatprep.subr.mxu0 0.0
    %272 = vmatpush1.msra.mxu0 %v75
    %273 = vmatprep.subr.mxu0 0.0
    %274 = vmatpush1.msra.mxu0 %v76
    %275 = vmatprep.subr.mxu0 0.0
    %276 = vmatpush1.msra.mxu0 %v77
    %277 = vmatprep.subr.mxu0 0.0
    %278 = vmatpush1.msra.mxu0 %v78
    %279 = vmatprep.subr.mxu0 0.0
    %280 = vmatpush1.msra.mxu0 %v79
    %281 = vmatprep.subr.mxu0 0.0
    %282 = vmatpush1.msra.mxu0 %v80
    %283 = vmatprep.subr.mxu0 0.0
    %284 = vmatpush1.msra.mxu0 %v81
    %285 = vmatprep.subr.mxu0 0.0
    %286 = vmatpush1.msra.mxu0 %v82
    %287 = vmatprep.subr.mxu0 0.0
    %288 = vmatpush1.msra.mxu0 %v83
    %289 = vmatprep.subr.mxu0 0.0
    %290 = vmatpush1.msra.mxu0 %v84
    %291 = vmatprep.subr.mxu0 0.0
    %292 = vmatpush1.msra.mxu0 %v85
    %293 = vmatprep.subr.mxu0 0.0
    %294 = vmatpush1.msra.mxu0 %v86
    %295 = vmatprep.subr.mxu0 0.0
    %296 = vmatpush1.msra.mxu0 %v87
    %297 = vmatprep.subr.mxu0 0.0
    %298 = vmatpush1.msra.mxu0 %v88
    %299 = vmatprep.subr.mxu0 0.0
    %300 = vmatpush1.msra.mxu0 0.0
    %301 = vmatprep.subr.mxu0 0.0
    %302 = vmatpush1.msra.mxu0 0.0
    %303 = vmatprep.subr.mxu0 0.0
    %304 = vmatpush1.msra.mxu0 0.0
    %305 = vmatprep.subr.mxu0 0.0
    %306 = vmatpush1.msra.mxu0 0.0
    %307 = vmatprep.subr.mxu0 0.0
    %308 = vmatpush1.msra.mxu0 0.0
    %309 = vmatprep.subr.mxu0 0.0
    %310 = vmatpush1.msra.mxu0 0.0
    %311 = vmatprep.subr.mxu0 0.0
    %312 = vmatpush1.msra.mxu0 0.0
    %313 = vmatprep.subr.mxu0 0.0
    %314 = vmatpush1.msra.mxu0 0.0
    %315 = vmatprep.subr.mxu0 0.0
    %316 = vmatpush1.msra.mxu0 0.0
    %317 = vmatprep.subr.mxu0 0.0
    %318 = vmatpush1.msra.mxu0 0.0
    %319 = vmatprep.subr.mxu0 0.0
    %320 = vmatpush1.msra.mxu0 0.0
    %321 = vmatprep.subr.mxu0 0.0
    %322 = vmatpush1.msra.mxu0 0.0
    %323 = vmatprep.subr.mxu0 0.0
    %324 = vmatpush1.msra.mxu0 0.0
    %325 = vmatprep.subr.mxu0 0.0
    %326 = vmatpush1.msra.mxu0 0.0
    %327 = vmatprep.subr.mxu0 0.0
    %328 = vmatpush1.msra.mxu0 0.0
    %329 = vmatprep.subr.mxu0 0.0
    %330 = vmatpush1.msra.mxu0 0.0
    %331 = vmatprep.mubr.f32.mxu0 0.0
    %332 = vmatmul.mubr.f32.gmra.mrb[0].mxu0 %v196
    %v333 = vpop.f32.mrb[0].mxu0
    %v334 = vadd.f32 %v264, %v333
    %v335 = vpop.f32.mrb[0].mxu0
    %336 = vdwg.mxu0
    %v337 = vtanh.pop %v334
    %s338 = sld [smem:[#allocation2 + $0x2]]
    %v339 = vstv %s338
    %vm340 = vcmp.eq.s32.totalorder %v106, %v339
    %v341 = vsel %vm340, 1.0, 0.0
    %s342 = sld [smem:[#allocation2 + $0x82]]
    %v343 = vstv %s342
    %vm344 = vcmp.eq.s32.totalorder %v106, %v343
    %v345 = vsel %vm344, 1.0, 0.0
    %v346 = vsel %vm115, %v341, %v345
    %347 = vmatprep.subr.mxu0 0.0
    %348 = vmatpush1.msra.mxu0 %v89
    %349 = vmatprep.subr.mxu0 0.0
    %350 = vmatpush1.msra.mxu0 %v90
    %351 = vmatprep.subr.mxu0 0.0
    %352 = vmatpush1.msra.mxu0 %v91
    %353 = vmatprep.subr.mxu0 0.0
    %354 = vmatpush1.msra.mxu0 %v92
    %355 = vmatprep.subr.mxu0 0.0
    %356 = vmatpush1.msra.mxu0 %v93
    %357 = vmatprep.subr.mxu0 0.0
    %358 = vmatpush1.msra.mxu0 %v94
    %359 = vmatprep.subr.mxu0 0.0
    %360 = vmatpush1.msra.mxu0 %v95
    %361 = vmatprep.subr.mxu0 0.0
    %362 = vmatpush1.msra.mxu0 %v96
    %363 = vmatprep.subr.mxu0 0.0
    %364 = vmatpush1.msra.mxu0 %v97
    %365 = vmatprep.subr.mxu0 0.0
    %366 = vmatpush1.msra.mxu0 %v98
    %367 = vmatprep.subr.mxu0 0.0
    %368 = vmatpush1.msra.mxu0 %v99
    %369 = vmatprep.subr.mxu0 0.0
    %370 = vmatpush1.msra.mxu0 %v100
    %371 = vmatprep.subr.mxu0 0.0
    %372 = vmatpush1.msra.mxu0 %v101
    %373 = vmatprep.subr.mxu0 0.0
    %374 = vmatpush1.msra.mxu0 %v102
    %375 = vmatprep.subr.mxu0 0.0
    %376 = vmatpush1.msra.mxu0 %v103
    %377 = vmatprep.subr.mxu0 0.0
    %378 = vmatpush1.msra.mxu0 %v104
    %379 = vmatprep.subr.mxu0 0.0
    %380 = vmatpush1.msra.mxu0 0.0
    %381 = vmatprep.subr.mxu0 0.0
    %382 = vmatpush1.msra.mxu0 0.0
    %383 = vmatprep.subr.mxu0 0.0
    %384 = vmatpush1.msra.mxu0 0.0
    %385 = vmatprep.subr.mxu0 0.0
    %386 = vmatpush1.msra.mxu0 0.0
    %387 = vmatprep.subr.mxu0 0.0
    %388 = vmatpush1.msra.mxu0 0.0
    %389 = vmatprep.subr.mxu0 0.0
    %390 = vmatpush1.msra.mxu0 0.0
    %391 = vmatprep.subr.mxu0 0.0
    %392 = vmatpush1.msra.mxu0 0.0
    %393 = vmatprep.subr.mxu0 0.0
    %394 = vmatpush1.msra.mxu0 0.0
    %395 = vmatprep.subr.mxu0 0.0
    %396 = vmatpush1.msra.mxu0 0.0
    %397 = vmatprep.subr.mxu0 0.0
    %398 = vmatpush1.msra.mxu0 0.0
    %399 = vmatprep.subr.mxu0 0.0
    %400 = vmatpush1.msra.mxu0 0.0
    %401 = vmatprep.subr.mxu0 0.0
    %402 = vmatpush1.msra.mxu0 0.0
    %403 = vmatprep.subr.mxu0 0.0
    %404 = vmatpush1.msra.mxu0 0.0
    %405 = vmatprep.subr.mxu0 0.0
    %406 = vmatpush1.msra.mxu0 0.0
    %407 = vmatprep.subr.mxu0 0.0
    %408 = vmatpush1.msra.mxu0 0.0
    %409 = vmatprep.subr.mxu0 0.0
    %410 = vmatpush1.msra.mxu0 0.0
    %411 = vmatprep.mubr.f32.mxu0 0.0
    %412 = vmatmul.mubr.f32.gmra.mrb[0].mxu0 %v337
    %v413 = vpop.f32.mrb[0].mxu0
    %v414 = vadd.f32 0.0, %v413
    %v415 = vpop.f32.mrb[0].mxu0
    %416 = vdwg.mxu0
    %417 = vmatprep.subr.mxu0 0.0
    %418 = vmatpush1.msra.mxu0 %v73
    %419 = vmatprep.subr.mxu0 0.0
    %420 = vmatpush1.msra.mxu0 %v74
    %421 = vmatprep.subr.mxu0 0.0
    %422 = vmatpush1.msra.mxu0 %v75
    %423 = vmatprep.subr.mxu0 0.0
    %424 = vmatpush1.msra.mxu0 %v76
    %425 = vmatprep.subr.mxu0 0.0
    %426 = vmatpush1.msra.mxu0 %v77
    %427 = vmatprep.subr.mxu0 0.0
    %428 = vmatpush1.msra.mxu0 %v78
    %429 = vmatprep.subr.mxu0 0.0
    %430 = vmatpush1.msra.mxu0 %v79
    %431 = vmatprep.subr.mxu0 0.0
    %432 = vmatpush1.msra.mxu0 %v80
    %433 = vmatprep.subr.mxu0 0.0
    %434 = vmatpush1.msra.mxu0 %v81
    %435 = vmatprep.subr.mxu0 0.0
    %436 = vmatpush1.msra.mxu0 %v82
    %437 = vmatprep.subr.mxu0 0.0
    %438 = vmatpush1.msra.mxu0 %v83
    %439 = vmatprep.subr.mxu0 0.0
    %440 = vmatpush1.msra.mxu0 %v84
    %441 = vmatprep.subr.mxu0 0.0
    %442 = vmatpush1.msra.mxu0 %v85
    %443 = vmatprep.subr.mxu0 0.0
    %444 = vmatpush1.msra.mxu0 %v86
    %445 = vmatprep.subr.mxu0 0.0
    %446 = vmatpush1.msra.mxu0 %v87
    %447 = vmatprep.subr.mxu0 0.0
    %448 = vmatpush1.msra.mxu0 %v88
    %449 = vmatprep.subr.mxu0 0.0
    %450 = vmatpush1.msra.mxu0 0.0
    %451 = vmatprep.subr.mxu0 0.0
    %452 = vmatpush1.msra.mxu0 0.0
    %453 = vmatprep.subr.mxu0 0.0
    %454 = vmatpush1.msra.mxu0 0.0
    %455 = vmatprep.subr.mxu0 0.0
    %456 = vmatpush1.msra.mxu0 0.0
    %457 = vmatprep.subr.mxu0 0.0
    %458 = vmatpush1.msra.mxu0 0.0
    %459 = vmatprep.subr.mxu0 0.0
    %460 = vmatpush1.msra.mxu0 0.0
    %461 = vmatprep.subr.mxu0 0.0
    %462 = vmatpush1.msra.mxu0 0.0
    %463 = vmatprep.subr.mxu0 0.0
    %464 = vmatpush1.msra.mxu0 0.0
    %465 = vmatprep.subr.mxu0 0.0
    %466 = vmatpush1.msra.mxu0 0.0
    %467 = vmatprep.subr.mxu0 0.0
    %468 = vmatpush1.msra.mxu0 0.0
    %469 = vmatprep.subr.mxu0 0.0
    %470 = vmatpush1.msra.mxu0 0.0
    %471 = vmatprep.subr.mxu0 0.0
    %472 = vmatpush1.msra.mxu0 0.0
    %473 = vmatprep.subr.mxu0 0.0
    %474 = vmatpush1.msra.mxu0 0.0
    %475 = vmatprep.subr.mxu0 0.0
    %476 = vmatpush1.msra.mxu0 0.0
    %477 = vmatprep.subr.mxu0 0.0
    %478 = vmatpush1.msra.mxu0 0.0
    %479 = vmatprep.subr.mxu0 0.0
    %480 = vmatpush1.msra.mxu0 0.0
    %481 = vmatprep.mubr.f32.mxu0 0.0
    %482 = vmatmul.mubr.f32.gmra.mrb[0].mxu0 %v346
    %v483 = vpop.f32.mrb[0].mxu0
    %v484 = vadd.f32 %v414, %v483
    %v485 = vpop.f32.mrb[0].mxu0
    %486 = vdwg.mxu0
    %v487 = vtanh.pop %v484
    %s488 = sld [smem:[#allocation2 + $0x3]]
    %v489 = vstv %s488
    %vm490 = vcmp.eq.s32.totalorder %v106, %v489
    %v491 = vsel %vm490, 1.0, 0.0
    %s492 = sld [smem:[#allocation2 + $0x83]]
    %v493 = vstv %s492
    %vm494 = vcmp.eq.s32.totalorder %v106, %v493
    %v495 = vsel %vm494, 1.0, 0.0
    %v496 = vsel %vm115, %v491, %v495
    %497 = vmatprep.subr.mxu0 0.0
    %498 = vmatpush1.msra.mxu0 %v89
    %499 = vmatprep.subr.mxu0 0.0
    %500 = vmatpush1.msra.mxu0 %v90
    %501 = vmatprep.subr.mxu0 0.0
    %502 = vmatpush1.msra.mxu0 %v91
    %503 = vmatprep.subr.mxu0 0.0
    %504 = vmatpush1.msra.mxu0 %v92
    %505 = vmatprep.subr.mxu0 0.0
    %506 = vmatpush1.msra.mxu0 %v93
    %507 = vmatprep.subr.mxu0 0.0
    %508 = vmatpush1.msra.mxu0 %v94
    %509 = vmatprep.subr.mxu0 0.0
    %510 = vmatpush1.msra.mxu0 %v95
    %511 = vmatprep.subr.mxu0 0.0
    %512 = vmatpush1.msra.mxu0 %v96
    %513 = vmatprep.subr.mxu0 0.0
    %514 = vmatpush1.msra.mxu0 %v97
    %515 = vmatprep.subr.mxu0 0.0
    %516 = vmatpush1.msra.mxu0 %v98
    %517 = vmatprep.subr.mxu0 0.0
    %518 = vmatpush1.msra.mxu0 %v99
    %519 = vmatprep.subr.mxu0 0.0
    %520 = vmatpush1.msra.mxu0 %v100
    %521 = vmatprep.subr.mxu0 0.0
    %522 = vmatpush1.msra.mxu0 %v101
    %523 = vmatprep.subr.mxu0 0.0
    %524 = vmatpush1.msra.mxu0 %v102
    %525 = vmatprep.subr.mxu0 0.0
    %526 = vmatpush1.msra.mxu0 %v103
    %527 = vmatprep.subr.mxu0 0.0
    %528 = vmatpush1.msra.mxu0 %v104
    %529 = vmatprep.subr.mxu0 0.0
    %530 = vmatpush1.msra.mxu0 0.0
    %531 = vmatprep.subr.mxu0 0.0
    %532 = vmatpush1.msra.mxu0 0.0
    %533 = vmatprep.subr.mxu0 0.0
    %534 = vmatpush1.msra.mxu0 0.0
    %535 = vmatprep.subr.mxu0 0.0
    %536 = vmatpush1.msra.mxu0 0.0
    %537 = vmatprep.subr.mxu0 0.0
    %538 = vmatpush1.msra.mxu0 0.0
    %539 = vmatprep.subr.mxu0 0.0
    %540 = vmatpush1.msra.mxu0 0.0
    %541 = vmatprep.subr.mxu0 0.0
    %542 = vmatpush1.msra.mxu0 0.0
    %543 = vmatprep.subr.mxu0 0.0
    %544 = vmatpush1.msra.mxu0 0.0
    %545 = vmatprep.subr.mxu0 0.0
    %546 = vmatpush1.msra.mxu0 0.0
    %547 = vmatprep.subr.mxu0 0.0
    %548 = vmatpush1.msra.mxu0 0.0
    %549 = vmatprep.subr.mxu0 0.0
    %550 = vmatpush1.msra.mxu0 0.0
    %551 = vmatprep.subr.mxu0 0.0
    %552 = vmatpush1.msra.mxu0 0.0
    %553 = vmatprep.subr.mxu0 0.0
    %554 = vmatpush1.msra.mxu0 0.0
    %555 = vmatprep.subr.mxu0 0.0
    %556 = vmatpush1.msra.mxu0 0.0
    %557 = vmatprep.subr.mxu0 0.0
    %558 = vmatpush1.msra.mxu0 0.0
    %559 = vmatprep.subr.mxu0 0.0
    %560 = vmatpush1.msra.mxu0 0.0
    %561 = vmatprep.mubr.f32.mxu0 0.0
    %562 = vmatmul.mubr.f32.gmra.mrb[0].mxu0 %v487
    %v563 = vpop.f32.mrb[0].mxu0
    %v564 = vadd.f32 0.0, %v563
    %v565 = vpop.f32.mrb[0].mxu0
    %566 = vdwg.mxu0
    %567 = vmatprep.subr.mxu0 0.0
    %568 = vmatpush1.msra.mxu0 %v73
    %569 = vmatprep.subr.mxu0 0.0
    %570 = vmatpush1.msra.mxu0 %v74
    %571 = vmatprep.subr.mxu0 0.0
    %572 = vmatpush1.msra.mxu0 %v75
    %573 = vmatprep.subr.mxu0 0.0
    %574 = vmatpush1.msra.mxu0 %v76
    %575 = vmatprep.subr.mxu0 0.0
    %576 = vmatpush1.msra.mxu0 %v77
    %577 = vmatprep.subr.mxu0 0.0
    %578 = vmatpush1.msra.mxu0 %v78
    %579 = vmatprep.subr.mxu0 0.0
    %580 = vmatpush1.msra.mxu0 %v79
    %581 = vmatprep.subr.mxu0 0.0
    %582 = vmatpush1.msra.mxu0 %v80
    %583 = vmatprep.subr.mxu0 0.0
    %584 = vmatpush1.msra.mxu0 %v81
    %585 = vmatprep.subr.mxu0 0.0
    %586 = vmatpush1.msra.mxu0 %v82
    %587 = vmatprep.subr.mxu0 0.0
    %588 = vmatpush1.msra.mxu0 %v83
    %589 = vmatprep.subr.mxu0 0.0
    %590 = vmatpush1.msra.mxu0 %v84
    %591 = vmatprep.subr.mxu0 0.0
    %592 = vmatpush1.msra.mxu0 %v85
    %593 = vmatprep.subr.mxu0 0.0
    %594 = vmatpush1.msra.mxu0 %v86
    %595 = vmatprep.subr.mxu0 0.0
    %596 = vmatpush1.msra.mxu0 %v87
    %597 = vmatprep.subr.mxu0 0.0
    %598 = vmatpush1.msra.mxu0 %v88
    %599 = vmatprep.subr.mxu0 0.0
    %600 = vmatpush1.msra.mxu0 0.0
    %601 = vmatprep.subr.mxu0 0.0
    %602 = vmatpush1.msra.mxu0 0.0
    %603 = vmatprep.subr.mxu0 0.0
    %604 = vmatpush1.msra.mxu0 0.0
    %605 = vmatprep.subr.mxu0 0.0
    %606 = vmatpush1.msra.mxu0 0.0
    %607 = vmatprep.subr.mxu0 0.0
    %608 = vmatpush1.msra.mxu0 0.0
    %609 = vmatprep.subr.mxu0 0.0
    %610 = vmatpush1.msra.mxu0 0.0
    %611 = vmatprep.subr.mxu0 0.0
    %612 = vmatpush1.msra.mxu0 0.0
    %613 = vmatprep.subr.mxu0 0.0
    %614 = vmatpush1.msra.mxu0 0.0
    %615 = vmatprep.subr.mxu0 0.0
    %616 = vmatpush1.msra.mxu0 0.0
    %617 = vmatprep.subr.mxu0 0.0
    %618 = vmatpush1.msra.mxu0 0.0
    %619 = vmatprep.subr.mxu0 0.0
    %620 = vmatpush1.msra.mxu0 0.0
    %621 = vmatprep.subr.mxu0 0.0
    %622 = vmatpush1.msra.mxu0 0.0
    %623 = vmatprep.subr.mxu0 0.0
    %624 = vmatpush1.msra.mxu0 0.0
    %625 = vmatprep.subr.mxu0 0.0
    %626 = vmatpush1.msra.mxu0 0.0
    %627 = vmatprep.subr.mxu0 0.0
    %628 = vmatpush1.msra.mxu0 0.0
    %629 = vmatprep.subr.mxu0 0.0
    %630 = vmatpush1.msra.mxu0 0.0
    %631 = vmatprep.mubr.f32.mxu0 0.0
    %632 = vmatmul.mubr.f32.gmra.mrb[0].mxu0 %v496
    %v633 = vpop.f32.mrb[0].mxu0
    %v634 = vadd.f32 %v564, %v633
    %v635 = vpop.f32.mrb[0].mxu0
    %636 = vdwg.mxu0
    %v637 = vtanh.pop %v634
    %s638 = sld [smem:[#allocation2 + $0x4]]
    %v639 = vstv %s638
    %vm640 = vcmp.eq.s32.totalorder %v106, %v639
    %v641 = vsel %vm640, 1.0, 0.0
    %s642 = sld [smem:[#allocation2 + $0x84]]
    %v643 = vstv %s642
    %vm644 = vcmp.eq.s32.totalorder %v106, %v643
    %v645 = vsel %vm644, 1.0, 0.0
    %v646 = vsel %vm115, %v641, %v645
    %647 = vmatprep.subr.mxu0 0.0
    %648 = vmatpush1.msra.mxu0 %v89
    %649 = vmatprep.subr.mxu0 0.0
    %650 = vmatpush1.msra.mxu0 %v90
    %651 = vmatprep.subr.mxu0 0.0
    %652 = vmatpush1.msra.mxu0 %v91
    %653 = vmatprep.subr.mxu0 0.0
    %654 = vmatpush1.msra.mxu0 %v92
    %655 = vmatprep.subr.mxu0 0.0
    %656 = vmatpush1.msra.mxu0 %v93
    %657 = vmatprep.subr.mxu0 0.0
    %658 = vmatpush1.msra.mxu0 %v94
    %659 = vmatprep.subr.mxu0 0.0
    %660 = vmatpush1.msra.mxu0 %v95
    %661 = vmatprep.subr.mxu0 0.0
    %662 = vmatpush1.msra.mxu0 %v96
    %663 = vmatprep.subr.mxu0 0.0
    %664 = vmatpush1.msra.mxu0 %v97
    %665 = vmatprep.subr.mxu0 0.0
    %666 = vmatpush1.msra.mxu0 %v98
    %667 = vmatprep.subr.mxu0 0.0
    %668 = vmatpush1.msra.mxu0 %v99
    %669 = vmatprep.subr.mxu0 0.0
    %670 = vmatpush1.msra.mxu0 %v100
    %671 = vmatprep.subr.mxu0 0.0
    %672 = vmatpush1.msra.mxu0 %v101
    %673 = vmatprep.subr.mxu0 0.0
    %674 = vmatpush1.msra.mxu0 %v102
    %675 = vmatprep.subr.mxu0 0.0
    %676 = vmatpush1.msra.mxu0 %v103
    %677 = vmatprep.subr.mxu0 0.0
    %678 = vmatpush1.msra.mxu0 %v104
    %679 = vmatprep.subr.mxu0 0.0
    %680 = vmatpush1.msra.mxu0 0.0
    %681 = vmatprep.subr.mxu0 0.0
    %682 = vmatpush1.msra.mxu0 0.0
    %683 = vmatprep.subr.mxu0 0.0
    %684 = vmatpush1.msra.mxu0 0.0
    %685 = vmatprep.subr.mxu0 0.0
    %686 = vmatpush1.msra.mxu0 0.0
    %687 = vmatprep.subr.mxu0 0.0
    %688 = vmatpush1.msra.mxu0 0.0
    %689 = vmatprep.subr.mxu0 0.0
    %690 = vmatpush1.msra.mxu0 0.0
    %691 = vmatprep.subr.mxu0 0.0
    %692 = vmatpush1.msra.mxu0 0.0
    %693 = vmatprep.subr.mxu0 0.0
    %694 = vmatpush1.msra.mxu0 0.0
    %695 = vmatprep.subr.mxu0 0.0
    %696 = vmatpush1.msra.mxu0 0.0
    %697 = vmatprep.subr.mxu0 0.0
    %698 = vmatpush1.msra.mxu0 0.0
    %699 = vmatprep.subr.mxu0 0.0
    %700 = vmatpush1.msra.mxu0 0.0
    %701 = vmatprep.subr.mxu0 0.0
    %702 = vmatpush1.msra.mxu0 0.0
    %703 = vmatprep.subr.mxu0 0.0
    %704 = vmatpush1.msra.mxu0 0.0
    %705 = vmatprep.subr.mxu0 0.0
    %706 = vmatpush1.msra.mxu0 0.0
    %707 = vmatprep.subr.mxu0 0.0
    %708 = vmatpush1.msra.mxu0 0.0
    %709 = vmatprep.subr.mxu0 0.0
    %710 = vmatpush1.msra.mxu0 0.0
    %711 = vmatprep.mubr.f32.mxu0 0.0
    %712 = vmatmul.mubr.f32.gmra.mrb[0].mxu0 %v637
    %v713 = vpop.f32.mrb[0].mxu0
    %v714 = vadd.f32 0.0, %v713
    %v715 = vpop.f32.mrb[0].mxu0
    %716 = vdwg.mxu0
    %717 = vmatprep.subr.mxu0 0.0
    %718 = vmatpush1.msra.mxu0 %v73
    %719 = vmatprep.subr.mxu0 0.0
    %720 = vmatpush1.msra.mxu0 %v74
    %721 = vmatprep.subr.mxu0 0.0
    %722 = vmatpush1.msra.mxu0 %v75
    %723 = vmatprep.subr.mxu0 0.0
    %724 = vmatpush1.msra.mxu0 %v76
    %725 = vmatprep.subr.mxu0 0.0
    %726 = vmatpush1.msra.mxu0 %v77
    %727 = vmatprep.subr.mxu0 0.0
    %728 = vmatpush1.msra.mxu0 %v78
    %729 = vmatprep.subr.mxu0 0.0
    %730 = vmatpush1.msra.mxu0 %v79
    %731 = vmatprep.subr.mxu0 0.0
    %732 = vmatpush1.msra.mxu0 %v80
    %733 = vmatprep.subr.mxu0 0.0
    %734 = vmatpush1.msra.mxu0 %v81
    %735 = vmatprep.subr.mxu0 0.0
    %736 = vmatpush1.msra.mxu0 %v82
    %737 = vmatprep.subr.mxu0 0.0
    %738 = vmatpush1.msra.mxu0 %v83
    %739 = vmatprep.subr.mxu0 0.0
    %740 = vmatpush1.msra.mxu0 %v84
    %741 = vmatprep.subr.mxu0 0.0
    %742 = vmatpush1.msra.mxu0 %v85
    %743 = vmatprep.subr.mxu0 0.0
    %744 = vmatpush1.msra.mxu0 %v86
    %745 = vmatprep.subr.mxu0 0.0
    %746 = vmatpush1.msra.mxu0 %v87
    %747 = vmatprep.subr.mxu0 0.0
    %748 = vmatpush1.msra.mxu0 %v88
    %749 = vmatprep.subr.mxu0 0.0
    %750 = vmatpush1.msra.mxu0 0.0
    %751 = vmatprep.subr.mxu0 0.0
    %752 = vmatpush1.msra.mxu0 0.0
    %753 = vmatprep.subr.mxu0 0.0
    %754 = vmatpush1.msra.mxu0 0.0
    %755 = vmatprep.subr.mxu0 0.0
    %756 = vmatpush1.msra.mxu0 0.0
    %757 = vmatprep.subr.mxu0 0.0
    %758 = vmatpush1.msra.mxu0 0.0
    %759 = vmatprep.subr.mxu0 0.0
    %760 = vmatpush1.msra.mxu0 0.0
    %761 = vmatprep.subr.mxu0 0.0
    %762 = vmatpush1.msra.mxu0 0.0
    %763 = vmatprep.subr.mxu0 0.0
    %764 = vmatpush1.msra.mxu0 0.0
    %765 = vmatprep.subr.mxu0 0.0
    %766 = vmatpush1.msra.mxu0 0.0
    %767 = vmatprep.subr.mxu0 0.0
    %768 = vmatpush1.msra.mxu0 0.0
    %769 = vmatprep.subr.mxu0 0.0
    %770 = vmatpush1.msra.mxu0 0.0
    %771 = vmatprep.subr.mxu0 0.0
    %772 = vmatpush1.msra.mxu0 0.0
    %773 = vmatprep.subr.mxu0 0.0
    %774 = vmatpush1.msra.mxu0 0.0
    %775 = vmatprep.subr.mxu0 0.0
    %776 = vmatpush1.msra.mxu0 0.0
    %777 = vmatprep.subr.mxu0 0.0
    %778 = vmatpush1.msra.mxu0 0.0
    %779 = vmatprep.subr.mxu0 0.0
    %780 = vmatpush1.msra.mxu0 0.0
    %781 = vmatprep.mubr.f32.mxu0 0.0
    %782 = vmatmul.mubr.f32.gmra.mrb[0].mxu0 %v646
    %v783 = vpop.f32.mrb[0].mxu0
    %v784 = vadd.f32 %v714, %v783
    %v785 = vpop.f32.mrb[0].mxu0
    %786 = vdwg.mxu0
    %v787 = vtanh.pop %v784
    %s788 = sld [smem:[#allocation2 + $0x5]]
    %v789 = vstv %s788
    %vm790 = vcmp.eq.s32.totalorder %v106, %v789
    %v791 = vsel %vm790, 1.0, 0.0
    %s792 = sld [smem:[#allocation2 + $0x85]]
    %v793 = vstv %s792
    %vm794 = vcmp.eq.s32.totalorder %v106, %v793
    %v795 = vsel %vm794, 1.0, 0.0
    %v796 = vsel %vm115, %v791, %v795
    %797 = vmatprep.subr.mxu0 0.0
    %798 = vmatpush1.msra.mxu0 %v89
    %799 = vmatprep.subr.mxu0 0.0
    %800 = vmatpush1.msra.mxu0 %v90
    %801 = vmatprep.subr.mxu0 0.0
    %802 = vmatpush1.msra.mxu0 %v91
    %803 = vmatprep.subr.mxu0 0.0
    %804 = vmatpush1.msra.mxu0 %v92
    %805 = vmatprep.subr.mxu0 0.0
    %806 = vmatpush1.msra.mxu0 %v93
    %807 = vmatprep.subr.mxu0 0.0
    %808 = vmatpush1.msra.mxu0 %v94
    %809 = vmatprep.subr.mxu0 0.0
    %810 = vmatpush1.msra.mxu0 %v95
    %811 = vmatprep.subr.mxu0 0.0
    %812 = vmatpush1.msra.mxu0 %v96
    %813 = vmatprep.subr.mxu0 0.0
    %814 = vmatpush1.msra.mxu0 %v97
    %815 = vmatprep.subr.mxu0 0.0
    %816 = vmatpush1.msra.mxu0 %v98
    %817 = vmatprep.subr.mxu0 0.0
    %818 = vmatpush1.msra.mxu0 %v99
    %819 = vmatprep.subr.mxu0 0.0
    %820 = vmatpush1.msra.mxu0 %v100
    %821 = vmatprep.subr.mxu0 0.0
    %822 = vmatpush1.msra.mxu0 %v101
    %823 = vmatprep.subr.mxu0 0.0
    %824 = vmatpush1.msra.mxu0 %v102
    %825 = vmatprep.subr.mxu0 0.0
    %826 = vmatpush1.msra.mxu0 %v103
    %827 = vmatprep.subr.mxu0 0.0
    %828 = vmatpush1.msra.mxu0 %v104
    %829 = vmatprep.subr.mxu0 0.0
    %830 = vmatpush1.msra.mxu0 0.0
    %831 = vmatprep.subr.mxu0 0.0
    %832 = vmatpush1.msra.mxu0 0.0
    %833 = vmatprep.subr.mxu0 0.0
    %834 = vmatpush1.msra.mxu0 0.0
    %835 = vmatprep.subr.mxu0 0.0
    %836 = vmatpush1.msra.mxu0 0.0
    %837 = vmatprep.subr.mxu0 0.0
    %838 = vmatpush1.msra.mxu0 0.0
    %839 = vmatprep.subr.mxu0 0.0
    %840 = vmatpush1.msra.mxu0 0.0
    %841 = vmatprep.subr.mxu0 0.0
    %842 = vmatpush1.msra.mxu0 0.0
    %843 = vmatprep.subr.mxu0 0.0
    %844 = vmatpush1.msra.mxu0 0.0
    %845 = vmatprep.subr.mxu0 0.0
    %846 = vmatpush1.msra.mxu0 0.0
    %847 = vmatprep.subr.mxu0 0.0
    %848 = vmatpush1.msra.mxu0 0.0
    %849 = vmatprep.subr.mxu0 0.0
    %850 = vmatpush1.msra.mxu0 0.0
    %851 = vmatprep.subr.mxu0 0.0
    %852 = vmatpush1.msra.mxu0 0.0
    %853 = vmatprep.subr.mxu0 0.0
    %854 = vmatpush1.msra.mxu0 0.0
    %855 = vmatprep.subr.mxu0 0.0
    %856 = vmatpush1.msra.mxu0 0.0
    %857 = vmatprep.subr.mxu0 0.0
    %858 = vmatpush1.msra.mxu0 0.0
    %859 = vmatprep.subr.mxu0 0.0
    %860 = vmatpush1.msra.mxu0 0.0
    %861 = vmatprep.mubr.f32.mxu0 0.0
    %862 = vmatmul.mubr.f32.gmra.mrb[0].mxu0 %v787
    %v863 = vpop.f32.mrb[0].mxu0
    %v864 = vadd.f32 0.0, %v863
    %v865 = vpop.f32.mrb[0].mxu0
    %866 = vdwg.mxu0
    %867 = vmatprep.subr.mxu0 0.0
    %868 = vmatpush1.msra.mxu0 %v73
    %869 = vmatprep.subr.mxu0 0.0
    %870 = vmatpush1.msra.mxu0 %v74
    %871 = vmatprep.subr.mxu0 0.0
    %872 = vmatpush1.msra.mxu0 %v75
    %873 = vmatprep.subr.mxu0 0.0
    %874 = vmatpush1.msra.mxu0 %v76
    %875 = vmatprep.subr.mxu0 0.0
    %876 = vmatpush1.msra.mxu0 %v77
    %877 = vmatprep.subr.mxu0 0.0
    %878 = vmatpush1.msra.mxu0 %v78
    %879 = vmatprep.subr.mxu0 0.0
    %880 = vmatpush1.msra.mxu0 %v79
    %881 = vmatprep.subr.mxu0 0.0
    %882 = vmatpush1.msra.mxu0 %v80
    %883 = vmatprep.subr.mxu0 0.0
    %884 = vmatpush1.msra.mxu0 %v81
    %885 = vmatprep.subr.mxu0 0.0
    %886 = vmatpush1.msra.mxu0 %v82
    %887 = vmatprep.subr.mxu0 0.0
    %888 = vmatpush1.msra.mxu0 %v83
    %889 = vmatprep.subr.mxu0 0.0
    %890 = vmatpush1.msra.mxu0 %v84
    %891 = vmatprep.subr.mxu0 0.0
    %892 = vmatpush1.msra.mxu0 %v85
    %893 = vmatprep.subr.mxu0 0.0
    %894 = vmatpush1.msra.mxu0 %v86
    %895 = vmatprep.subr.mxu0 0.0
    %896 = vmatpush1.msra.mxu0 %v87
    %897 = vmatprep.subr.mxu0 0.0
    %898 = vmatpush1.msra.mxu0 %v88
    %899 = vmatprep.subr.mxu0 0.0
    %900 = vmatpush1.msra.mxu0 0.0
    %901 = vmatprep.subr.mxu0 0.0
    %902 = vmatpush1.msra.mxu0 0.0
    %903 = vmatprep.subr.mxu0 0.0
    %904 = vmatpush1.msra.mxu0 0.0
    %905 = vmatprep.subr.mxu0 0.0
    %906 = vmatpush1.msra.mxu0 0.0
    %907 = vmatprep.subr.mxu0 0.0
    %908 = vmatpush1.msra.mxu0 0.0
    %909 = vmatprep.subr.mxu0 0.0
    %910 = vmatpush1.msra.mxu0 0.0
    %911 = vmatprep.subr.mxu0 0.0
    %912 = vmatpush1.msra.mxu0 0.0
    %913 = vmatprep.subr.mxu0 0.0
    %914 = vmatpush1.msra.mxu0 0.0
    %915 = vmatprep.subr.mxu0 0.0
    %916 = vmatpush1.msra.mxu0 0.0
    %917 = vmatprep.subr.mxu0 0.0
    %918 = vmatpush1.msra.mxu0 0.0
    %919 = vmatprep.subr.mxu0 0.0
    %920 = vmatpush1.msra.mxu0 0.0
    %921 = vmatprep.subr.mxu0 0.0
    %922 = vmatpush1.msra.mxu0 0.0
    %923 = vmatprep.subr.mxu0 0.0
    %924 = vmatpush1.msra.mxu0 0.0
    %925 = vmatprep.subr.mxu0 0.0
    %926 = vmatpush1.msra.mxu0 0.0
    %927 = vmatprep.subr.mxu0 0.0
    %928 = vmatpush1.msra.mxu0 0.0
    %929 = vmatprep.subr.mxu0 0.0
    %930 = vmatpush1.msra.mxu0 0.0
    %931 = vmatprep.mubr.f32.mxu0 0.0
    %932 = vmatmul.mubr.f32.gmra.mrb[0].mxu0 %v796
    %v933 = vpop.f32.mrb[0].mxu0
    %v934 = vadd.f32 %v864, %v933
    %v935 = vpop.f32.mrb[0].mxu0
    %936 = vdwg.mxu0
    %v937 = vtanh.pop %v934
    %s938 = sld [smem:[#allocation2 + $0x6]]
    %v939 = vstv %s938
    %vm940 = vcmp.eq.s32.totalorder %v106, %v939
    %v941 = vsel %vm940, 1.0, 0.0
    %s942 = sld [smem:[#allocation2 + $0x86]]
    %v943 = vstv %s942
    %vm944 = vcmp.eq.s32.totalorder %v106, %v943
    %v945 = vsel %vm944, 1.0, 0.0
    %v946 = vsel %vm115, %v941, %v945
    %947 = vmatprep.subr.mxu0 0.0
    %948 = vmatpush1.msra.mxu0 %v89
    %949 = vmatprep.subr.mxu0 0.0
    %950 = vmatpush1.msra.mxu0 %v90
    %951 = vmatprep.subr.mxu0 0.0
    %952 = vmatpush1.msra.mxu0 %v91
    %953 = vmatprep.subr.mxu0 0.0
    %954 = vmatpush1.msra.mxu0 %v92
    %955 = vmatprep.subr.mxu0 0.0
    %956 = vmatpush1.msra.mxu0 %v93
    %957 = vmatprep.subr.mxu0 0.0
    %958 = vmatpush1.msra.mxu0 %v94
    %959 = vmatprep.subr.mxu0 0.0
    %960 = vmatpush1.msra.mxu0 %v95
    %961 = vmatprep.subr.mxu0 0.0
    %962 = vmatpush1.msra.mxu0 %v96
    %963 = vmatprep.subr.mxu0 0.0
    %964 = vmatpush1.msra.mxu0 %v97
    %965 = vmatprep.subr.mxu0 0.0
    %966 = vmatpush1.msra.mxu0 %v98
    %967 = vmatprep.subr.mxu0 0.0
    %968 = vmatpush1.msra.mxu0 %v99
    %969 = vmatprep.subr.mxu0 0.0
    %970 = vmatpush1.msra.mxu0 %v100
    %971 = vmatprep.subr.mxu0 0.0
    %972 = vmatpush1.msra.mxu0 %v101
    %973 = vmatprep.subr.mxu0 0.0
    %974 = vmatpush1.msra.mxu0 %v102
    %975 = vmatprep.subr.mxu0 0.0
    %976 = vmatpush1.msra.mxu0 %v103
    %977 = vmatprep.subr.mxu0 0.0
    %978 = vmatpush1.msra.mxu0 %v104
    %979 = vmatprep.subr.mxu0 0.0
    %980 = vmatpush1.msra.mxu0 0.0
    %981 = vmatprep.subr.mxu0 0.0
    %982 = vmatpush1.msra.mxu0 0.0
    %983 = vmatprep.subr.mxu0 0.0
    %984 = vmatpush1.msra.mxu0 0.0
    %985 = vmatprep.subr.mxu0 0.0
    %986 = vmatpush1.msra.mxu0 0.0
    %987 = vmatprep.subr.mxu0 0.0
    %988 = vmatpush1.msra.mxu0 0.0
    %989 = vmatprep.subr.mxu0 0.0
    %990 = vmatpush1.msra.mxu0 0.0
    %991 = vmatprep.subr.mxu0 0.0
    %992 = vmatpush1.msra.mxu0 0.0
    %993 = vmatprep.subr.mxu0 0.0
    %994 = vmatpush1.msra.mxu0 0.0
    %995 = vmatprep.subr.mxu0 0.0
    %996 = vmatpush1.msra.mxu0 0.0
    %997 = vmatprep.subr.mxu0 0.0
    %998 = vmatpush1.msra.mxu0 0.0
    %999 = vmatprep.subr.mxu0 0.0
    %1000 = vmatpush1.msra.mxu0 0.0
    %1001 = vmatprep.subr.mxu0 0.0
    %1002 = vmatpush1.msra.mxu0 0.0
    %1003 = vmatprep.subr.mxu0 0.0
    %1004 = vmatpush1.msra.mxu0 0.0
    %1005 = vmatprep.subr.mxu0 0.0
    %1006 = vmatpush1.msra.mxu0 0.0
    %1007 = vmatprep.subr.mxu0 0.0
    %1008 = vmatpush1.msra.mxu0 0.0
    %1009 = vmatprep.subr.mxu0 0.0
    %1010 = vmatpush1.msra.mxu0 0.0
    %1011 = vmatprep.mubr.f32.mxu0 0.0
    %1012 = vmatmul.mubr.f32.gmra.mrb[0].mxu0 %v937
    %v1013 = vpop.f32.mrb[0].mxu0
    %v1014 = vadd.f32 0.0, %v1013
    %v1015 = vpop.f32.mrb[0].mxu0
    %1016 = vdwg.mxu0
    %1017 = vmatprep.subr.mxu0 0.0
    %1018 = vmatpush1.msra.mxu0 %v73
    %1019 = vmatprep.subr.mxu0 0.0
    %1020 = vmatpush1.msra.mxu0 %v74
    %1021 = vmatprep.subr.mxu0 0.0
    %1022 = vmatpush1.msra.mxu0 %v75
    %1023 = vmatprep.subr.mxu0 0.0
    %1024 = vmatpush1.msra.mxu0 %v76
    %1025 = vmatprep.subr.mxu0 0.0
    %1026 = vmatpush1.msra.mxu0 %v77
    %1027 = vmatprep.subr.mxu0 0.0
    %1028 = vmatpush1.msra.mxu0 %v78
    %1029 = vmatprep.subr.mxu0 0.0
    %1030 = vmatpush1.msra.mxu0 %v79
    %1031 = vmatprep.subr.mxu0 0.0
    %1032 = vmatpush1.msra.mxu0 %v80
    %1033 = vmatprep.subr.mxu0 0.0
    %1034 = vmatpush1.msra.mxu0 %v81
    %1035 = vmatprep.subr.mxu0 0.0
    %1036 = vmatpush1.msra.mxu0 %v82
    %1037 = vmatprep.subr.mxu0 0.0
    %1038 = vmatpush1.msra.mxu0 %v83
    %1039 = vmatprep.subr.mxu0 0.0
    %1040 = vmatpush1.msra.mxu0 %v84
    %1041 = vmatprep.subr.mxu0 0.0
    %1042 = vmatpush1.msra.mxu0 %v85
    %1043 = vmatprep.subr.mxu0 0.0
    %1044 = vmatpush1.msra.mxu0 %v86
    %1045 = vmatprep.subr.mxu0 0.0
    %1046 = vmatpush1.msra.mxu0 %v87
    %1047 = vmatprep.subr.mxu0 0.0
    %1048 = vmatpush1.msra.mxu0 %v88
    %1049 = vmatprep.subr.mxu0 0.0
    %1050 = vmatpush1.msra.mxu0 0.0
    %1051 = vmatprep.subr.mxu0 0.0
    %1052 = vmatpush1.msra.mxu0 0.0
    %1053 = vmatprep.subr.mxu0 0.0
    %1054 = vmatpush1.msra.mxu0 0.0
    %1055 = vmatprep.subr.mxu0 0.0
    %1056 = vmatpush1.msra.mxu0 0.0
    %1057 = vmatprep.subr.mxu0 0.0
    %1058 = vmatpush1.msra.mxu0 0.0
    %1059 = vmatprep.subr.mxu0 0.0
    %1060 = vmatpush1.msra.mxu0 0.0
    %1061 = vmatprep.subr.mxu0 0.0
    %1062 = vmatpush1.msra.mxu0 0.0
    %1063 = vmatprep.subr.mxu0 0.0
    %1064 = vmatpush1.msra.mxu0 0.0
    %1065 = vmatprep.subr.mxu0 0.0
    %1066 = vmatpush1.msra.mxu0 0.0
    %1067 = vmatprep.subr.mxu0 0.0
    %1068 = vmatpush1.msra.mxu0 0.0
    %1069 = vmatprep.subr.mxu0 0.0
    %1070 = vmatpush1.msra.mxu0 0.0
    %1071 = vmatprep.subr.mxu0 0.0
    %1072 = vmatpush1.msra.mxu0 0.0
    %1073 = vmatprep.subr.mxu0 0.0
    %1074 = vmatpush1.msra.mxu0 0.0
    %1075 = vmatprep.subr.mxu0 0.0
    %1076 = vmatpush1.msra.mxu0 0.0
    %1077 = vmatprep.subr.mxu0 0.0
    %1078 = vmatpush1.msra.mxu0 0.0
    %1079 = vmatprep.subr.mxu0 0.0
    %1080 = vmatpush1.msra.mxu0 0.0
    %1081 = vmatprep.mubr.f32.mxu0 0.0
    %1082 = vmatmul.mubr.f32.gmra.mrb[0].mxu0 %v946
    %v1083 = vpop.f32.mrb[0].mxu0
    %v1084 = vadd.f32 %v1014, %v1083
    %v1085 = vpop.f32.mrb[0].mxu0
    %1086 = vdwg.mxu0
    %v1087 = vtanh.pop %v1084
    %s1088 = sld [smem:[#allocation2 + $0x7]]
    %v1089 = vstv %s1088
    %vm1090 = vcmp.eq.s32.totalorder %v106, %v1089
    %v1091 = vsel %vm1090, 1.0, 0.0
    %s1092 = sld [smem:[#allocation2 + $0x87]]
    %v1093 = vstv %s1092
    %vm1094 = vcmp.eq.s32.totalorder %v106, %v1093
    %v1095 = vsel %vm1094, 1.0, 0.0
    %v1096 = vsel %vm115, %v1091, %v1095
    %1097 = vmatprep.subr.mxu0 0.0
    %1098 = vmatpush1.msra.mxu0 %v89
    %1099 = vmatprep.subr.mxu0 0.0
    %1100 = vmatpush1.msra.mxu0 %v90
    %1101 = vmatprep.subr.mxu0 0.0
    %1102 = vmatpush1.msra.mxu0 %v91
    %1103 = vmatprep.subr.mxu0 0.0
    %1104 = vmatpush1.msra.mxu0 %v92
    %1105 = vmatprep.subr.mxu0 0.0
    %1106 = vmatpush1.msra.mxu0 %v93
    %1107 = vmatprep.subr.mxu0 0.0
    %1108 = vmatpush1.msra.mxu0 %v94
    %1109 = vmatprep.subr.mxu0 0.0
    %1110 = vmatpush1.msra.mxu0 %v95
    %1111 = vmatprep.subr.mxu0 0.0
    %1112 = vmatpush1.msra.mxu0 %v96
    %1113 = vmatprep.subr.mxu0 0.0
    %1114 = vmatpush1.msra.mxu0 %v97
    %1115 = vmatprep.subr.mxu0 0.0
    %1116 = vmatpush1.msra.mxu0 %v98
    %1117 = vmatprep.subr.mxu0 0.0
    %1118 = vmatpush1.msra.mxu0 %v99
    %1119 = vmatprep.subr.mxu0 0.0
    %1120 = vmatpush1.msra.mxu0 %v100
    %1121 = vmatprep.subr.mxu0 0.0
    %1122 = vmatpush1.msra.mxu0 %v101
    %1123 = vmatprep.subr.mxu0 0.0
    %1124 = vmatpush1.msra.mxu0 %v102
    %1125 = vmatprep.subr.mxu0 0.0
    %1126 = vmatpush1.msra.mxu0 %v103
    %1127 = vmatprep.subr.mxu0 0.0
    %1128 = vmatpush1.msra.mxu0 %v104
    %1129 = vmatprep.subr.mxu0 0.0
    %1130 = vmatpush1.msra.mxu0 0.0
    %1131 = vmatprep.subr.mxu0 0.0
    %1132 = vmatpush1.msra.mxu0 0.0
    %1133 = vmatprep.subr.mxu0 0.0
    %1134 = vmatpush1.msra.mxu0 0.0
    %1135 = vmatprep.subr.mxu0 0.0
    %1136 = vmatpush1.msra.mxu0 0.0
    %1137 = vmatprep.subr.mxu0 0.0
    %1138 = vmatpush1.msra.mxu0 0.0
    %1139 = vmatprep.subr.mxu0 0.0
    %1140 = vmatpush1.msra.mxu0 0.0
    %1141 = vmatprep.subr.mxu0 0.0
    %1142 = vmatpush1.msra.mxu0 0.0
    %1143 = vmatprep.subr.mxu0 0.0
    %1144 = vmatpush1.msra.mxu0 0.0
    %1145 = vmatprep.subr.mxu0 0.0
    %1146 = vmatpush1.msra.mxu0 0.0
    %1147 = vmatprep.subr.mxu0 0.0
    %1148 = vmatpush1.msra.mxu0 0.0
    %1149 = vmatprep.subr.mxu0 0.0
    %1150 = vmatpush1.msra.mxu0 0.0
    %1151 = vmatprep.subr.mxu0 0.0
    %1152 = vmatpush1.msra.mxu0 0.0
    %1153 = vmatprep.subr.mxu0 0.0
    %1154 = vmatpush1.msra.mxu0 0.0
    %1155 = vmatprep.subr.mxu0 0.0
    %1156 = vmatpush1.msra.mxu0 0.0
    %1157 = vmatprep.subr.mxu0 0.0
    %1158 = vmatpush1.msra.mxu0 0.0
    %1159 = vmatprep.subr.mxu0 0.0
    %1160 = vmatpush1.msra.mxu0 0.0
    %1161 = vmatprep.mubr.f32.mxu0 0.0
    %1162 = vmatmul.mubr.f32.gmra.mrb[0].mxu0 %v1087
    %v1163 = vpop.f32.mrb[0].mxu0
    %v1164 = vadd.f32 0.0, %v1163
    %v1165 = vpop.f32.mrb[0].mxu0
    %1166 = vdwg.mxu0
    %1167 = vmatprep.subr.mxu0 0.0
    %1168 = vmatpush1.msra.mxu0 %v73
    %1169 = vmatprep.subr.mxu0 0.0
    %1170 = vmatpush1.msra.mxu0 %v74
    %1171 = vmatprep.subr.mxu0 0.0
    %1172 = vmatpush1.msra.mxu0 %v75
    %1173 = vmatprep.subr.mxu0 0.0
    %1174 = vmatpush1.msra.mxu0 %v76
    %1175 = vmatprep.subr.mxu0 0.0
    %1176 = vmatpush1.msra.mxu0 %v77
    %1177 = vmatprep.subr.mxu0 0.0
    %1178 = vmatpush1.msra.mxu0 %v78
    %1179 = vmatprep.subr.mxu0 0.0
    %1180 = vmatpush1.msra.mxu0 %v79
    %1181 = vmatprep.subr.mxu0 0.0
    %1182 = vmatpush1.msra.mxu0 %v80
    %1183 = vmatprep.subr.mxu0 0.0
    %1184 = vmatpush1.msra.mxu0 %v81
    %1185 = vmatprep.subr.mxu0 0.0
    %1186 = vmatpush1.msra.mxu0 %v82
    %1187 = vmatprep.subr.mxu0 0.0
    %1188 = vmatpush1.msra.mxu0 %v83
    %1189 = vmatprep.subr.mxu0 0.0
    %1190 = vmatpush1.msra.mxu0 %v84
    %1191 = vmatprep.subr.mxu0 0.0
    %1192 = vmatpush1.msra.mxu0 %v85
    %1193 = vmatprep.subr.mxu0 0.0
    %1194 = vmatpush1.msra.mxu0 %v86
    %1195 = vmatprep.subr.mxu0 0.0
    %1196 = vmatpush1.msra.mxu0 %v87
    %1197 = vmatprep.subr.mxu0 0.0
    %1198 = vmatpush1.msra.mxu0 %v88
    %1199 = vmatprep.subr.mxu0 0.0
    %1200 = vmatpush1.msra.mxu0 0.0
    %1201 = vmatprep.subr.mxu0 0.0
    %1202 = vmatpush1.msra.mxu0 0.0
    %1203 = vmatprep.subr.mxu0 0.0
    %1204 = vmatpush1.msra.mxu0 0.0
    %1205 = vmatprep.subr.mxu0 0.0
    %1206 = vmatpush1.msra.mxu0 0.0
    %1207 = vmatprep.subr.mxu0 0.0
    %1208 = vmatpush1.msra.mxu0 0.0
    %1209 = vmatprep.subr.mxu0 0.0
    %1210 = vmatpush1.msra.mxu0 0.0
    %1211 = vmatprep.subr.mxu0 0.0
    %1212 = vmatpush1.msra.mxu0 0.0
    %1213 = vmatprep.subr.mxu0 0.0
    %1214 = vmatpush1.msra.mxu0 0.0
    %1215 = vmatprep.subr.mxu0 0.0
    %1216 = vmatpush1.msra.mxu0 0.0
    %1217 = vmatprep.subr.mxu0 0.0
    %1218 = vmatpush1.msra.mxu0 0.0
    %1219 = vmatprep.subr.mxu0 0.0
    %1220 = vmatpush1.msra.mxu0 0.0
    %1221 = vmatprep.subr.mxu0 0.0
    %1222 = vmatpush1.msra.mxu0 0.0
    %1223 = vmatprep.subr.mxu0 0.0
    %1224 = vmatpush1.msra.mxu0 0.0
    %1225 = vmatprep.subr.mxu0 0.0
    %1226 = vmatpush1.msra.mxu0 0.0
    %1227 = vmatprep.subr.mxu0 0.0
    %1228 = vmatpush1.msra.mxu0 0.0
    %1229 = vmatprep.subr.mxu0 0.0
    %1230 = vmatpush1.msra.mxu0 0.0
    %1231 = vmatprep.mubr.f32.mxu0 0.0
    %1232 = vmatmul.mubr.f32.gmra.mrb[0].mxu0 %v1096
    %v1233 = vpop.f32.mrb[0].mxu0
    %v1234 = vadd.f32 %v1164, %v1233
    %v1235 = vpop.f32.mrb[0].mxu0
    %1236 = vdwg.mxu0
    %v1237 = vtanh.pop %v1234
    %v1238 = vld [vmem:[#allocation9] sm:$0xff]
    %v1239 = vld [vmem:[#allocation9 + $0x8] sm:$0xff]
    %v1240 = vld [vmem:[#allocation9 + $0x10] sm:$0xff]
    %v1241 = vld [vmem:[#allocation9 + $0x18] sm:$0xff]
    %v1242 = vld [vmem:[#allocation9 + $0x20] sm:$0xff]
    %v1243 = vld [vmem:[#allocation9 + $0x28] sm:$0xff]
    %v1244 = vld [vmem:[#allocation9 + $0x30] sm:$0xff]
    %v1245 = vld [vmem:[#allocation9 + $0x38] sm:$0xff]
    %v1246 = vld [vmem:[#allocation9 + $0x40] sm:$0xff]
    %v1247 = vld [vmem:[#allocation9 + $0x48] sm:$0xff]
    %v1248 = vld [vmem:[#allocation9 + $0x50] sm:$0xff]
    %v1249 = vld [vmem:[#allocation9 + $0x58] sm:$0xff]
    %v1250 = vld [vmem:[#allocation9 + $0x60] sm:$0xff]
    %v1251 = vld [vmem:[#allocation9 + $0x68] sm:$0xff]
    %v1252 = vld [vmem:[#allocation9 + $0x70] sm:$0xff]
    %v1253 = vld [vmem:[#allocation9 + $0x78] sm:$0xff]
    %v1254 = vld [vmem:[%s4] sm:$0x1]
    %v1256 = vlaneseq
    %v1257 = vshrl.u32 %v1256, 7
    %v1258 = vsub.s32 0, %v1257
    %v1259 = vrot.slane %v1254, %v1258
    %1261 = vmatprep.subr.mxu0 0.0
    %1262 = vmatpush1.msra.mxu0 %v1238
    %1263 = vmatprep.subr.mxu0 0.0
    %1264 = vmatpush1.msra.mxu0 %v1239
    %1265 = vmatprep.subr.mxu0 0.0
    %1266 = vmatpush1.msra.mxu0 %v1240
    %1267 = vmatprep.subr.mxu0 0.0
    %1268 = vmatpush1.msra.mxu0 %v1241
    %1269 = vmatprep.subr.mxu0 0.0
    %1270 = vmatpush1.msra.mxu0 %v1242
    %1271 = vmatprep.subr.mxu0 0.0
    %1272 = vmatpush1.msra.mxu0 %v1243
    %1273 = vmatprep.subr.mxu0 0.0
    %1274 = vmatpush1.msra.mxu0 %v1244
    %1275 = vmatprep.subr.mxu0 0.0
    %1276 = vmatpush1.msra.mxu0 %v1245
    %1277 = vmatprep.subr.mxu0 0.0
    %1278 = vmatpush1.msra.mxu0 %v1246
    %1279 = vmatprep.subr.mxu0 0.0
    %1280 = vmatpush1.msra.mxu0 %v1247
    %1281 = vmatprep.subr.mxu0 0.0
    %1282 = vmatpush1.msra.mxu0 %v1248
    %1283 = vmatprep.subr.mxu0 0.0
    %1284 = vmatpush1.msra.mxu0 %v1249
    %1285 = vmatprep.subr.mxu0 0.0
    %1286 = vmatpush1.msra.mxu0 %v1250
    %1287 = vmatprep.subr.mxu0 0.0
    %1288 = vmatpush1.msra.mxu0 %v1251
    %1289 = vmatprep.subr.mxu0 0.0
    %1290 = vmatpush1.msra.mxu0 %v1252
    %1291 = vmatprep.subr.mxu0 0.0
    %1292 = vmatpush1.msra.mxu0 %v1253
    %1293 = vmatprep.subr.mxu0 0.0
    %1294 = vmatpush1.msra.mxu0 0.0
    %1295 = vmatprep.subr.mxu0 0.0
    %1296 = vmatpush1.msra.mxu0 0.0
    %1297 = vmatprep.subr.mxu0 0.0
    %1298 = vmatpush1.msra.mxu0 0.0
    %1299 = vmatprep.subr.mxu0 0.0
    %1300 = vmatpush1.msra.mxu0 0.0
    %1301 = vmatprep.subr.mxu0 0.0
    %1302 = vmatpush1.msra.mxu0 0.0
    %1303 = vmatprep.subr.mxu0 0.0
    %1304 = vmatpush1.msra.mxu0 0.0
    %1305 = vmatprep.subr.mxu0 0.0
    %1306 = vmatpush1.msra.mxu0 0.0
    %1307 = vmatprep.subr.mxu0 0.0
    %1308 = vmatpush1.msra.mxu0 0.0
    %1309 = vmatprep.subr.mxu0 0.0
    %1310 = vmatpush1.msra.mxu0 0.0
    %1311 = vmatprep.subr.mxu0 0.0
    %1312 = vmatpush1.msra.mxu0 0.0
    %1313 = vmatprep.subr.mxu0 0.0
    %1314 = vmatpush1.msra.mxu0 0.0
    %1315 = vmatprep.subr.mxu0 0.0
    %1316 = vmatpush1.msra.mxu0 0.0
    %1317 = vmatprep.subr.mxu0 0.0
    %1318 = vmatpush1.msra.mxu0 0.0
    %1319 = vmatprep.subr.mxu0 0.0
    %1320 = vmatpush1.msra.mxu0 0.0
    %1321 = vmatprep.subr.mxu0 0.0
    %1322 = vmatpush1.msra.mxu0 0.0
    %1323 = vmatprep.subr.mxu0 0.0
    %1324 = vmatpush1.msra.mxu0 0.0
    %1325 = vmatprep.mubr.f32.mxu0 0.0
    %1326 = vmatmul.mubr.f32.gmra.mrb[0].mxu0 %v1237
    %v1327 = vpop.f32.mrb[0].mxu0
    %v1328 = vadd.f32 %v1259, %v1327
    %v1329 = vpop.f32.mrb[0].mxu0
    %1330 = vdwg.mxu0
    %vm1331 = vcmask 1041408
    %v1332 = vsel %vm1331, %v1328, -inf
    %1333 = vmax.xlane.f32.xlu0 %v1332
    %v1334 = vpop.xlane.xlu0 %1333
    %v1335 = vsub.f32 %v1328, %v1334
    %v1336 = vmul.f32 %v1335, 1.442695
    %v1337 = vpow.pop %v1336
    %v1338 = vsel %vm1331, %v1337, 0.0
    %1339 = vadd.xlane.f32.xlu0 %v1338
    %v1340 = vpop.xlane.xlu0 %1339
    %v1341 = vrcp.pop %v1340
    %v1342 = vmul.f32 %v1337, %v1341
    %1343 = vst [vmem:[#allocation10] sm:$0x3] %v1342
    // Predicated region
    $region38: #{rnn_forward.1} parent=1 // pred_check
      _
    $region39: #{rnn_forward.1} parent=1 // pred_check_branch
      %1345 = sbr.rel (0) target = $region41
    $region40: #{rnn_forward.1} parent=1 // pred_region
      %s1347 = ssub.s32 32, 32
      %1348 = vsyncadd [#allocation4], %s1347
      %s1350 = sshll.u32 [#allocation10], 4
      %s1351 = int_to_ptr.vmem [resolvable:$true] %s1350
      %1353 = dma.vmem_to_hbm [thread:$0]  %s1351, 32, %s5, [#allocation4]
    $region41: #{rnn_forward.1} parent=1 // pred_fallthru
      _
    // Predicated region
    $region42: #{rnn_forward.1} parent=1 // pred_check
      _
    $region43: #{rnn_forward.1} parent=1 // pred_check_branch
      %1355 = sbr.rel (0) target = $region45
    $region44: #{rnn_forward.1} parent=1 // pred_region
      %1356 = dma.done [#allocation4], 32
    $region45: #{rnn_forward.1} parent=1 // pred_fallthru
      _
    %1357 = vsyncpa [#allocation3], 1
    %1358 = vsyncpa [#allocation8], 1
    %1359 = vsyncpa [#allocation4], 1
    %1360 = vsyncpa [#allocation5], 1

</llo_original>
